<compile_context>
chip_gen: v5e
topology: v5e:2x2
jax: 0.10.0
libtpu: 0.0.40
codegen_flags: <defaults>
</compile_context>

<pallas_src>
import functools
import math

import jax
import jax.numpy as jnp
from jax import lax
from jax.experimental import pallas as pl
from jax.experimental.pallas import tpu as pltpu


def _round_up(n, m):
    return ((n + m - 1) // m) * m


@functools.lru_cache(maxsize=1)
def _vmem_limit_bytes():
    """Generation-aware scoped-VMEM limit (~3/4 of physical VMEM)."""
    try:
        cap = int(pltpu.get_tpu_info().vmem_capacity_bytes)
    except Exception:                       # query unavailable -> be conservative
        cap = 64 * 1024 * 1024              # assume v7x-sized VMEM
    return (3 * cap) // 4                   # 96 MiB on v5e/v6e, 48 MiB on v7x


# ---------------------------------------------------------------------------
# Kernel 1: 2x2 / stride-2 average pooling (with_conv=False, fir=False), NCHW
# ---------------------------------------------------------------------------
def _avgpool2x2_kernel(x_ref, o_ref):
    # x_ref: (1, TC, 2*TH, W) NCHW block (W on lanes, H on sublanes)
    # o_ref: (1, TC, TH, W//2)
    _, tc, hh, w = x_ref.shape
    th, ow = hh // 2, w // 2
    x = x_ref[0].astype(jnp.float32)
    # Sum the two H phases first (sublane-only work), then the two W phases:
    # the lane deinterleave runs once, on half the data.
    xh = x.reshape(tc, th, 2, w)
    sh = xh[:, :, 0, :] + xh[:, :, 1, :]           # (tc, th, w)
    sw = sh.reshape(tc, th, ow, 2)
    s = sw[..., 0] + sw[..., 1]                    # (tc, th, ow)
    o_ref[0] = (s * 0.25).astype(o_ref.dtype)


def avg_pool2x2_nchw(x_nchw, *, row_tile=None, chan_tile=None):
    B, C, H, W = x_nchw.shape
    assert H % 2 == 0 and W % 2 == 0
    OH, OW = H // 2, W // 2
    esz = x_nchw.dtype.itemsize
    # Target input-block size: ~16 MiB on 128-MiB chips, ~8 MiB on v7x.
    budget = _vmem_limit_bytes() // 6

    # Output-row tile: multiple of 8 (sublane aligned) or the full OH extent.
    if row_tile is None:
        cands = [d for d in range(1, OH + 1)
                 if OH % d == 0 and (d % 8 == 0 or d == OH)]
        fitting = [d for d in cands if 2 * d * W * esz <= budget]
        row_tile = max(fitting) if fitting else min(cands)
    assert OH % row_tile == 0 and (row_tile % 8 == 0 or row_tile == OH)
    th = row_tile

    # Channel tile: largest divisor of C keeping the input block within budget.
    if chan_tile is None:
        tc_cands = [d for d in range(1, C + 1)
                    if C % d == 0 and d * 2 * th * W * esz <= budget]
        chan_tile = max(tc_cands) if tc_cands else 1
    assert C % chan_tile == 0
    tc = chan_tile

    grid = (B, C // tc, OH // th)
    return pl.pallas_call(
        _avgpool2x2_kernel,
        out_shape=jax.ShapeDtypeStruct((B, C, OH, OW), x_nchw.dtype),
        grid=grid,
        in_specs=[pl.BlockSpec((1, tc, 2 * th, W), lambda b, c, h: (b, c, h, 0))],
        out_specs=pl.BlockSpec((1, tc, th, OW), lambda b, c, h: (b, c, h, 0)),
        compiler_params=pltpu.CompilerParams(
            dimension_semantics=("parallel", "parallel", "parallel"),
            vmem_limit_bytes=_vmem_limit_bytes()),
    )(x_nchw)


# ---------------------------------------------------------------------------
# Kernel 2: pad(0,1,0,1) + Conv2dSame(3x3, stride=2) (with_conv=True, fir=False)
# Operates on NHWC tiles; padding + halo handled in-kernel.
# ---------------------------------------------------------------------------
def _conv3x3_s2_kernel(xm_ref, xh_ref, w_ref, b_ref, o_ref, *,
                       H, row_axis, last_tile_overreads):
    # xm_ref: (1, RB, W, C)  rows [2*t*TOH, 2*t*TOH + RB) of the UNPADDED input
    #                        (multi-tile: last tile over-reads 2 rows, masked)
    # xh_ref: (1, 1, W, C)   top halo: original row 2*t*TOH - 1 (zeroed at t==0)
    # w_ref : (9, C, OCt)    HWIO weights, tap-major (kh*3 + kw)
    # b_ref : (1, OCt)
    # o_ref : (1, TOH, OW, OCt)
    t = pl.program_id(row_axis)
    _, RB, W, C = xm_ref.shape
    _, TOH, OW, OCt = o_ref.shape
    OW_p = _round_up(OW, 8)       # 8-aligned compute width; extra cols sliced off
    Q = 2 * OW_p + 2              # padded-column count (even, >= W + 3)

    x = xm_ref[0]                                                   # (RB, W, C)
    # Top padding / halo row (original row 2*t*TOH - 1; zero for the first tile).
    halo = jnp.where(t > 0, xh_ref[0], jnp.zeros_like(xh_ref[0]))   # (1, W, C)

    pieces = [halo]
    if last_tile_overreads:
        # Only the last row tile's block can read past H, and only in its last
        # 2 rows: zero just those (2-row select; pass-through on earlier tiles).
        tail = x[RB - 2:]
        row_id = (2 * TOH * t + RB - 2
                  + lax.broadcasted_iota(jnp.int32, (2, 1, 1), 0))
        tail = jnp.where(row_id < H, tail, jnp.zeros_like(tail))
        if RB > 2:
            pieces.append(x[:RB - 2])
        pieces.append(tail)
    else:
        pieces.append(x)          # single full-height tile: no over-read at all
    # Bottom zero rows: real bottom padding (+ one filler row so the row count
    # is even for the phase-split reshape; the filler row is never read).
    pieces.append(jnp.zeros((2 * TOH + 1 - RB, W, C), x.dtype))
    xr = jnp.concatenate(pieces, axis=0)                            # (2*TOH+2, W, C)

    # Left zero column + right zero columns (cols W..W+1 are real padding; any
    # column past that only feeds output columns >= OW, which are sliced off).
    zl = jnp.zeros((2 * TOH + 2, 1, C), x.dtype)
    zr = jnp.zeros((2 * TOH + 2, Q - 1 - W, C), x.dtype)
    xp = jnp.concatenate([zl, xr, zr], axis=1)                      # (2*TOH+2, Q, C)

    # Space-to-depth: split rows/cols into (index, stride-2 phase) so every tap
    # below is a static slice (no strided ref gathers).
    xp5 = xp.reshape(TOH + 1, 2, OW_p + 1, 2, C)

    # 9 accumulated (pixels, C) x (C, OCt) MXU dots, DEFAULT precision (bf16
    # MXU fast path for f32 models), f32 accumulation.  No 9x im2col buffer.
    acc = jnp.zeros((TOH * OW_p, OCt), jnp.float32)
    for kh in range(3):
        for kw in range(3):
            tap = xp5[kh // 2: kh // 2 + TOH, kh % 2,
                      kw // 2: kw // 2 + OW_p, kw % 2, :]
            tap = tap.reshape(TOH * OW_p, C)
            acc = acc + jnp.dot(tap, w_ref[kh * 3 + kw],
                                preferred_element_type=jnp.float32)
    acc = acc + b_ref[...].astype(jnp.float32)
    out = acc.reshape(TOH, OW_p, OCt)[:, :OW, :]
    o_ref[0] = out.astype(o_ref.dtype)


def _pick_conv_row_tile(OH, H, W, C, OCt, esz, w_esz, budget):
    OW = W // 2 + 1
    ow_p = _round_up(OW, 8)
    q = 2 * ow_p + 2
    best = 1
    for d in range(1, OH + 1):
        if OH % d:
            continue
        rb = H if d == OH else 2 * d
        need = (2 * rb * W * C * esz            # main input block (double-buffered)
                + 2 * W * C * esz               # halo row (double-buffered)
                + (2 * d + 2) * q * C * esz     # padded tile value
                + d * ow_p * C * esz            # one tap (transient)
                + d * ow_p * OCt * 4            # f32 accumulator
                + 2 * d * OW * OCt * esz        # output block (double-buffered)
                + 2 * 9 * C * OCt * w_esz)      # weight block (double-buffered)
        if need <= budget:
            best = d
    return best


def conv3x3_stride2_same_nhwc(x_nhwc, w_hwio, bias, *, row_tile=None):
    B, H, W, C = x_nhwc.shape
    assert H % 2 == 0 and W % 2 == 0
    OC = w_hwio.shape[-1]
    OH, OW = H // 2 + 1, W // 2 + 1
    esz = x_nhwc.dtype.itemsize
    w_esz = w_hwio.dtype.itemsize
    vmem_limit = _vmem_limit_bytes()

    # Out-channel tile: target the 256-wide MXU (v6e/v7x) when OC allows; 128
    # otherwise keeps v5e's 128-wide MXU full and the output lane-dense.
    if OC % 256 == 0:
        OCt = 256
    elif OC > 128 and OC % 128 == 0:
        OCt = 128
    else:
        OCt = OC
    NOC = OC // OCt

    if row_tile is None:
        row_tile = _pick_conv_row_tile(OH, H, W, C, OCt, esz, w_esz,
                                       vmem_limit // 2)
    TOH = row_tile
    assert OH % TOH == 0, "row_tile must divide OH"
    NT = OH // TOH
    RB = H if NT == 1 else 2 * TOH    # main block height (original input rows)

    w3 = w_hwio.reshape(9, C, OC)     # tap-major (kh, kw) x C x OC
    b2 = bias.reshape(1, OC)

    # Grid order: keep the operand whose block would otherwise be re-fetched
    # every grid step on an outer axis (weights vs input rows).
    w_block_bytes = 9 * C * OCt * w_esz
    x_block_bytes = RB * W * C * esz
    t_innermost = (NOC > 1) and (NT > 1) and (w_block_bytes > x_block_bytes)

    halo_row = lambda t: jnp.maximum(2 * TOH * t - 1, 0)
    if t_innermost:
        grid = (B, NOC, NT)
        row_axis = 2
        in_specs = [
            pl.BlockSpec((1, RB, W, C), lambda b, oc, t: (b, t, 0, 0)),
            pl.BlockSpec((1, 1, W, C), lambda b, oc, t: (b, halo_row(t), 0, 0)),
            pl.BlockSpec((9, C, OCt), lambda b, oc, t: (0, 0, oc)),
            pl.BlockSpec((1, OCt), lambda b, oc, t: (0, oc)),
        ]
        out_specs = pl.BlockSpec((1, TOH, OW, OCt), lambda b, oc, t: (b, t, 0, oc))
    else:
        grid = (B, NT, NOC)
        row_axis = 1
        in_specs = [
            pl.BlockSpec((1, RB, W, C), lambda b, t, oc: (b, t, 0, 0)),
            pl.BlockSpec((1, 1, W, C), lambda b, t, oc: (b, halo_row(t), 0, 0)),
            pl.BlockSpec((9, C, OCt), lambda b, t, oc: (0, 0, oc)),
            pl.BlockSpec((1, OCt), lambda b, t, oc: (0, oc)),
        ]
        out_specs = pl.BlockSpec((1, TOH, OW, OCt), lambda b, t, oc: (b, t, 0, oc))

    kernel = functools.partial(_conv3x3_s2_kernel, H=H, row_axis=row_axis,
                               last_tile_overreads=(NT > 1))

    flops = 2 * B * OH * OW * 9 * C * OC
    bytes_accessed = (x_nhwc.size * esz + w3.size * w_esz
                      + b2.size * bias.dtype.itemsize + B * OH * OW * OC * esz)

    return pl.pallas_call(
        kernel,
        out_shape=jax.ShapeDtypeStruct((B, OH, OW, OC), x_nhwc.dtype),
        grid=grid,
        in_specs=in_specs,
        out_specs=out_specs,
        compiler_params=pltpu.CompilerParams(
            dimension_semantics=("parallel", "parallel", "parallel"),
            vmem_limit_bytes=vmem_limit),
        cost_estimate=pl.CostEstimate(flops=flops, transcendentals=0,
                                      bytes_accessed=bytes_accessed),
    )(x_nhwc, x_nhwc, w3, b2)


# ---------------------------------------------------------------------------
# Module wrapper (parameters initialized deterministically in-script)
# ---------------------------------------------------------------------------
class DownsampleLayer:
    def __init__(self, in_ch=None, out_ch=None, with_conv=False, fir=False,
                 fir_kernel=(1, 3, 3, 1), *, key=None):
        out_ch = out_ch if out_ch else in_ch
        if fir:
            # TODO(synk): fir=True branches (downsample_2d / FIR-resampled
            # Conv2d) not implemented; their reference source was not provided.
            raise NotImplementedError("fir=True branch not implemented")
        self.fir = fir
        self.with_conv = with_conv
        self.out_ch = out_ch
        self.fir_kernel = fir_kernel
        if with_conv:
            # DDPM default_init(1.0) == variance_scaling(1.0, 'fan_avg', 'uniform')
            fan_in, fan_out = in_ch * 9, out_ch * 9
            limit = math.sqrt(3.0 / ((fan_in + fan_out) / 2.0))
            self.weight = jax.random.uniform(
                key, (3, 3, in_ch, out_ch), jnp.float32, minval=-limit, maxval=limit)
            self.bias = jnp.zeros((out_ch,), jnp.float32)       # nn.init.zeros_

    def __call__(self, x_nchw, *, row_tile=None, chan_tile=None):
        if self.with_conv:
            # One NCHW<->NHWC transpose pair so the contraction axis (C) sits
            # on the 128-lane dimension.  (A model-wide NHWC layout would
            # remove both of these HBM passes.)
            x = jnp.transpose(x_nchw, (0, 2, 3, 1))
            y = conv3x3_stride2_same_nhwc(x, self.weight, self.bias,
                                          row_tile=row_tile)
            return jnp.transpose(y, (0, 3, 1, 2))
        # Pooling has no channel contraction: run directly on NCHW, no transposes.
        return avg_pool2x2_nchw(x_nchw, row_tile=row_tile, chan_tile=chan_tile)


# ---------------------------------------------------------------------------
if __name__ == "__main__":
    key = jax.random.PRNGKey(0)
    kx, kx2, kw = jax.random.split(key, 3)
    B, C, H, W = 2, 4, 16, 16
    x = jax.random.normal(kx, (B, C, H, W), jnp.float32)

    # Branch 1: with_conv=False, fir=False  ->  F.avg_pool2d(x, 2, stride=2)
    pool_layer = DownsampleLayer(in_ch=C)
    y_pool = jax.block_until_ready(pool_layer(x))
    ref_pool = x.reshape(B, C, H // 2, 2, W // 2, 2).mean(axis=(3, 5))
    assert y_pool.shape == (B, C, H // 2, W // 2), y_pool.shape
    assert jnp.allclose(y_pool, ref_pool, atol=1e-5, rtol=1e-5)

    # Multi-tile pooling path (forced tiling) on a 32x32 input.
    x2 = jax.random.normal(kx2, (B, C, 32, 32), jnp.float32)
    y_pool2 = jax.block_until_ready(pool_layer(x2, row_tile=8, chan_tile=2))
    ref_pool2 = x2.reshape(B, C, 16, 2, 16, 2).mean(axis=(3, 5))
    assert jnp.allclose(y_pool2, ref_pool2, atol=1e-5, rtol=1e-5)

    # Branch 2: with_conv=True, fir=False  ->  pad(0,1,0,1) + Conv2dSame(3, s=2)
    OC = 8
    conv_layer = DownsampleLayer(in_ch=C, out_ch=OC, with_conv=True, key=kw)
    # Both the kernel and the reference run at DEFAULT MXU precision (bf16
    # multiply / f32 accumulate).  Pre-rounding inputs + weights to bf16 makes
    # the MXU rounding exact on both sides, so a tight tolerance still holds.
    x_c = x.astype(jnp.bfloat16).astype(jnp.float32)
    conv_layer.weight = conv_layer.weight.astype(jnp.bfloat16).astype(jnp.float32)

    w_oihw = jnp.transpose(conv_layer.weight, (3, 2, 0, 1))
    xpad = jnp.pad(x_c, ((0, 0), (0, 0), (1, 2), (1, 2)))
    ref_conv = lax.conv_general_dilated(
        xpad, w_oihw, (2, 2), "VALID",
        dimension_numbers=("NCHW", "OIHW", "NCHW"))
    ref_conv = ref_conv + conv_layer.bias[None, :, None, None]

    # Default path: single full-height tile (no halo, no over-read).
    y_conv = jax.block_until_ready(conv_layer(x_c))
    assert y_conv.shape == (B, OC, H // 2 + 1, W // 2 + 1), y_conv.shape
    assert jnp.allclose(y_conv, ref_conv, atol=1e-3, rtol=1e-3), (
        float(jnp.max(jnp.abs(y_conv - ref_conv))))

    # Forced multi-tile paths: halo rows + last-tile bottom-pad masking.
    y_conv_t3 = jax.block_until_ready(conv_layer(x_c, row_tile=3))
    assert jnp.allclose(y_conv_t3, ref_conv, atol=1e-3, rtol=1e-3)
    y_conv_t1 = jax.block_until_ready(conv_layer(x_c, row_tile=1))
    assert jnp.allclose(y_conv_t1, ref_conv, atol=1e-3, rtol=1e-3)

    print("KERNEL_OK")
</pallas_src>

<mosaic_0001>
module attributes {stable_mosaic.version = 11 : i64} {
  func.func @_avgpool2x2_kernel(%arg0: i32, %arg1: i32, %arg2: i32, %arg3: memref<1x4x16x16xf32, #tpu.memory_space<vmem>>, %arg4: memref<1x4x8x8xf32, #tpu.memory_space<vmem>>) attributes {dimension_semantics = [#tpu.dimension_semantics<parallel>, #tpu.dimension_semantics<parallel>, #tpu.dimension_semantics<parallel>], iteration_bounds = array<i64: 2, 1, 1>, scalar_prefetch = 0 : i64, scratch_operands = 0 : i64, tpu.core_type = #tpu.core_type<tc>, window_params = [{transform_indices = @transform_0, window_bounds = array<i64: 1, 4, 16, 16>}, {transform_indices = @transform_1, window_bounds = array<i64: 1, 4, 8, 8>}]} {
    %c0 = arith.constant 0 : index
    %c0_0 = arith.constant 0 : index
    %c0_1 = arith.constant 0 : index
    %c0_2 = arith.constant 0 : index
    %0 = vector.load %arg3[%c0, %c0_0, %c0_1, %c0_2] : memref<1x4x16x16xf32, #tpu.memory_space<vmem>>, vector<1x4x16x16xf32>
    %1 = vector.shape_cast %0 : vector<1x4x16x16xf32> to vector<4x16x16xf32>
    %2 = vector.shape_cast %1 : vector<4x16x16xf32> to vector<4x8x2x16xf32>
    %3 = vector.extract_strided_slice %2 {offsets = [0, 0, 0, 0], sizes = [4, 8, 1, 16], strides = [1, 1, 1, 1]} : vector<4x8x2x16xf32> to vector<4x8x1x16xf32>
    %4 = vector.shape_cast %3 : vector<4x8x1x16xf32> to vector<4x8x16xf32>
    %5 = vector.extract_strided_slice %2 {offsets = [0, 0, 1, 0], sizes = [4, 8, 1, 16], strides = [1, 1, 1, 1]} : vector<4x8x2x16xf32> to vector<4x8x1x16xf32>
    %6 = vector.shape_cast %5 : vector<4x8x1x16xf32> to vector<4x8x16xf32>
    %7 = arith.addf %4, %6 : vector<4x8x16xf32>
    %8 = vector.shape_cast %7 : vector<4x8x16xf32> to vector<4x8x8x2xf32>
    %9 = vector.extract_strided_slice %8 {offsets = [0, 0, 0, 0], sizes = [4, 8, 8, 1], strides = [1, 1, 1, 1]} : vector<4x8x8x2xf32> to vector<4x8x8x1xf32>
    %10 = vector.shape_cast %9 : vector<4x8x8x1xf32> to vector<4x8x8xf32>
    %11 = vector.extract_strided_slice %8 {offsets = [0, 0, 0, 1], sizes = [4, 8, 8, 1], strides = [1, 1, 1, 1]} : vector<4x8x8x2xf32> to vector<4x8x8x1xf32>
    %12 = vector.shape_cast %11 : vector<4x8x8x1xf32> to vector<4x8x8xf32>
    %13 = arith.addf %10, %12 : vector<4x8x8xf32>
    %cst = arith.constant 2.500000e-01 : f32
    %14 = vector.broadcast %cst : f32 to vector<4x8x8xf32>
    %15 = arith.mulf %13, %14 : vector<4x8x8xf32>
    %c0_3 = arith.constant 0 : index
    %c0_4 = arith.constant 0 : index
    %c0_5 = arith.constant 0 : index
    %c0_6 = arith.constant 0 : index
    %16 = vector.load %arg4[%c0_3, %c0_4, %c0_5, %c0_6] : memref<1x4x8x8xf32, #tpu.memory_space<vmem>>, vector<1x4x8x8xf32>
    %17 = vector.shape_cast %16 : vector<1x4x8x8xf32> to vector<4x8x8xf32>
    %18 = vector.shape_cast %15 : vector<4x8x8xf32> to vector<1x4x8x8xf32>
    tpu.vector_store %arg4[%c0_3, %c0_4, %c0_5, %c0_6], %18 {strides = array<i32>} : memref<1x4x8x8xf32, #tpu.memory_space<vmem>>, vector<1x4x8x8xf32>,
    return
  }
  func.func @transform_0(%arg0: i32, %arg1: i32, %arg2: i32) -> (i32, i32, i32, i32) {
    %c0_i32 = arith.constant 0 : i32
    %c0_i32_0 = arith.constant 0 : i32
    return %arg0, %arg1, %arg2, %c0_i32 : i32, i32, i32, i32
  }
  func.func @transform_1(%arg0: i32, %arg1: i32, %arg2: i32) -> (i32, i32, i32, i32) {
    %c0_i32 = arith.constant 0 : i32
    %c0_i32_0 = arith.constant 0 : i32
    return %arg0, %arg1, %arg2, %c0_i32 : i32, i32, i32, i32
  }
}

</mosaic_0001>

<llo_original>
// kernel: tpu_custom_call.1
$region0: #{tpu_custom_call.1}
  #allocation0 [shape = 'u32[]', space=smem, size = 0x4, offset = 0x4, fixed_abs, tag = 'smem constant byte address 0x4 - core index']
  #allocation1 [shape = 'u32[72,128]{1,0:T(1,128)}', space=vmem, size = 0x9000, scoped, tag = 'internal scratch']
  %s0 = inlined_call_operand.hbm [shape: f32[2,4,16,16], index: 0, kind: input, shape index: {}]
  %s1 = inlined_call_operand.hbm [shape: f32[2,4,8,8], index: 1, kind: output, shape index: {}]
  %s2 = sld [smem:[#allocation0]]
  $region41: #{tpu_custom_call.1} parent=0
    _
  %s4 = ssub.s32 1, %s2
  %s5 = scalar_select 0, %s4, %s2
  $region1: #{tpu_custom_call.1} parent=0
    #allocation2 [shape = 'u8[65536]{0}', space=vmem, size = 0x10000, scoped, tag = 'input window, operand 0']
    #allocation3 [shape = 's32[2]{0}', space=sflag, size = 0x8, scoped, tag = 'scoped memory for tpu_custom_call.1']
    #allocation4 [shape = 's32[2]{0}', space=sflag, size = 0x8, scoped, tag = 'scoped memory for tpu_custom_call.1']
    #allocation5 [shape = 'u8[32768]{0}', space=vmem, size = 0x8000, scoped, tag = 'output window, operand 0']
    %6 = vsyncpa [#allocation3], 0
    %s7 = scalar_lea.sflag [#allocation3], 1
    %8 = vsyncpa %s7, 0
    %9 = vsyncpa [#allocation4], 0
    %s10 = scalar_lea.sflag [#allocation4], 1
    %11 = vsyncpa %s10, 0
    loop: start=0, step=1, limit=4
    $region2: #{tpu_custom_call.1} parent=1 // loop_pre_header
      _
    $region3: #{tpu_custom_call.1} parent=1 // loop_header
      %s13 = sphi 0, %s17
      %p14 = scmp.ge.s32.totalorder %s13, 4
      %s20 = sphi 0, %s39
      %s21 = sphi 0, %s35
      %s22 = sphi 0, %s31
      %s23 = sphi 0, %s20
      %s24 = sphi 0, %s21
      %s25 = sphi 0, %s22
      %s26 = sphi 0, %s23
      %s27 = sphi 0, %s24
      %s28 = sphi 0, %s25
      %s46 = sphi 0, %s48
      %s49 = sphi 0, %s46
      %s50 = sphi 0, %s49
      %s66 = sphi 0, %s50
      %s76 = sphi 0, %s78
      %s79 = sphi 0, %s76
      %s80 = sphi 0, %s79
      %s96 = sphi 0, %s80
    $region4: #{tpu_custom_call.1} parent=1 // loop_header_branch
      %16 = sbr.rel (%p14) target = $region8
    $region5: #{tpu_custom_call.1} parent=1 // loop_body
      %s18 = ssub.s32 %s13, 1
      %s19 = ssub.s32 %s13, 2
      %s29 = sadd.s32 1, %s22
      %p30 = scmp.ge.s32.totalorder %s29, 1
      %s31 = scalar_select %p30, 0, %s29
      %s32 = sadd.s32 1, %s21
      %s33 = scalar_select %p30, %s32, %s21
      %p34 = scmp.ge.s32.totalorder %s33, 1
      %s35 = scalar_select %p34, 0, %s33
      %s36 = sadd.s32 1, %s20
      %s37 = scalar_select %p34, %s36, %s20
      %p38 = scmp.ge.s32.totalorder %s37, 2
      %s39 = scalar_select %p38, 0, %s37
      %s40 = ssub.s32 %s20, %s39
      %s41 = ssub.s32 %s21, %s35
      %s42 = sor.u32 %s40, %s41
      %s43 = ssub.s32 %s22, %s31
      %s44 = sor.u32 %s42, %s43
      %p45 = scmp.eq.s32.totalorder %s44, 0
      %s47 = sadd.s32 %s46, 1
      %s48 = scalar_select %p45, %s46, %s47
      %p51 = pneg %p45
      %p52 = scmp.eq.s32.totalorder %s13, 1
      %p53 = por %p51, %p52
      %p54 = scmp.ne.s32.totalorder %s46, %s49
      %p55 = scmp.eq.s32.totalorder %s13, 0
      %p56 = por %p54, %p55
      %p57 = scmp.ne.s32.totalorder %s46, %s49
      %p58 = scmp.eq.s32.totalorder %s18, 1
      %p59 = por %p57, %p58
      %p60 = scmp.ne.s32.totalorder %s49, %s50
      %p61 = scmp.eq.s32.totalorder %s18, 0
      %p62 = por %p60, %p61
      %p63 = scmp.ne.s32.totalorder %s49, %s50
      %p64 = scmp.eq.s32.totalorder %s19, 1
      %p65 = por %p63, %p64
      %p67 = scmp.ne.s32.totalorder %s50, %s66
      %p68 = scmp.eq.s32.totalorder %s19, 0
      %p69 = por %p67, %p68
      %s70 = ssub.s32 %s20, %s39
      %s71 = ssub.s32 %s21, %s35
      %s72 = sor.u32 %s70, %s71
      %s73 = ssub.s32 %s22, %s31
      %s74 = sor.u32 %s72, %s73
      %p75 = scmp.eq.s32.totalorder %s74, 0
      %s77 = sadd.s32 %s76, 1
      %s78 = scalar_select %p75, %s76, %s77
      %p81 = pneg %p75
      %p82 = scmp.eq.s32.totalorder %s13, 1
      %p83 = por %p81, %p82
      %p84 = scmp.ne.s32.totalorder %s76, %s79
      %p85 = scmp.eq.s32.totalorder %s13, 0
      %p86 = por %p84, %p85
      %p87 = scmp.ne.s32.totalorder %s76, %s79
      %p88 = scmp.eq.s32.totalorder %s18, 1
      %p89 = por %p87, %p88
      %p90 = scmp.ne.s32.totalorder %s79, %s80
      %p91 = scmp.eq.s32.totalorder %s18, 0
      %p92 = por %p90, %p91
      %p93 = scmp.ne.s32.totalorder %s79, %s80
      %p94 = scmp.eq.s32.totalorder %s19, 1
      %p95 = por %p93, %p94
      %p97 = scmp.ne.s32.totalorder %s80, %s96
      %p98 = scmp.eq.s32.totalorder %s19, 0
      %p99 = por %p97, %p98
      %p100 = scmp.le.s32.totalorder 1, %s13
      %p101 = scmp.lt.s32.totalorder %s13, 3
      %p102 = pnand %p100, %p101
      %p103 = pneg %p102
      // Predicated region
      $region9: #{tpu_custom_call.1} parent=5 // pred_check
        _
      $region10: #{tpu_custom_call.1} parent=5 // pred_check_branch
        %105 = sbr.rel (%p102) target = $region12
      $region11: #{tpu_custom_call.1} parent=5 // pred_region
        %s106 = ssub.s32 %s13, 1
      $region12: #{tpu_custom_call.1} parent=5 // pred_fallthru
        _
      %p107 = scmp.lt.s32.totalorder %s13, 2
      // Predicated region
      $region13: #{tpu_custom_call.1} parent=5 // pred_check
        %p108 = pneg %p107
      $region14: #{tpu_custom_call.1} parent=5 // pred_check_branch
        %110 = sbr.rel (%p108) target = $region16
      $region15: #{tpu_custom_call.1} parent=5 // pred_region
        // Predicated region
        $region17: #{tpu_custom_call.1} parent=15 // pred_check
          %p111 = pneg %p56
        $region18: #{tpu_custom_call.1} parent=15 // pred_check_branch
          %113 = sbr.rel (%p111) target = $region20
        $region19: #{tpu_custom_call.1} parent=15 // pred_region
          %s114 = sand.u32 %s46, 1
          %s115 = scalar_lea.sflag [#allocation3], %s114
          %s116 = sand.u32 %s46, 1
          %s117 = smul.addr %s116, 64
          %s118 = scalar_lea.vmem [#allocation2], %s117
          %s119 = smul.u32 4, %s21
          %s120 = smul.u32 2, %s22
          %122 = vsyncadd %s115, 0
          %s123 = smul.addr %s119, 2
          %s124 = sadd.s32 %s120, %s123
          %s125 = smul.addr %s20, 8
          %s126 = sadd.s32 %s124, %s125
          %s127 = smul.addr %s126, 8
          %s128 = scalar_lea.hbm %s0, %s127
          %s129 = sshll.u32 %s128, 4
          %s130 = int_to_ptr.hbm [resolvable:$true] %s129
          %s131 = sshll.u32 %s118, 4
          %s132 = int_to_ptr.vmem [resolvable:$true] %s131
          %137 = dma.hbm_to_vmem [thread:$0]  %s130, 1024, %s132, %s115, 128, 128, 8
        $region20: #{tpu_custom_call.1} parent=15 // pred_fallthru
          _
      $region16: #{tpu_custom_call.1} parent=5 // pred_fallthru
        _
      %p138 = scmp.le.s32.totalorder 1, %s13
      %p139 = scmp.lt.s32.totalorder %s13, 3
      %p140 = pnand %p138, %p139
      %p141 = pneg %p140
      // Predicated region
      $region21: #{tpu_custom_call.1} parent=5 // pred_check
        _
      $region22: #{tpu_custom_call.1} parent=5 // pred_check_branch
        %143 = sbr.rel (%p140) target = $region24
      $region23: #{tpu_custom_call.1} parent=5 // pred_region
        %s144 = ssub.s32 %s13, 1
        %s145 = sand.u32 %s49, 1
        %s146 = scalar_lea.sflag [#allocation3], %s145
        %s147 = sand.u32 %s49, 1
        %s148 = smul.addr %s147, 64
        %s149 = scalar_lea.vmem [#allocation2], %s148
        // Predicated region
        $region25: #{tpu_custom_call.1} parent=23 // pred_check
          %p150 = pneg %p62
        $region26: #{tpu_custom_call.1} parent=23 // pred_check_branch
          %152 = sbr.rel (%p150) target = $region28
        $region27: #{tpu_custom_call.1} parent=23 // pred_region
          %154 = dma.done %s146, 1024
        $region28: #{tpu_custom_call.1} parent=23 // pred_fallthru
          _
        %s155 = sand.u32 %s49, 1
        %s156 = scalar_lea.sflag [#allocation3], %s155
        %s157 = sand.u32 %s49, 1
        %s158 = smul.addr %s157, 64
        %s159 = scalar_lea.vmem [#allocation2], %s158
        %p160 = pneg %p62
        %p161 = pneg %p59
        %p162 = pneg %p92
        %p163 = pneg %p89
        %s164 = sand.u32 %s79, 1
        %s165 = scalar_lea.sflag [#allocation4], %s164
        %s166 = sand.u32 %s79, 1
        %s167 = smul.addr %s166, 32
        %s168 = scalar_lea.vmem [#allocation5], %s167
        %s169 = smul.u32 4, %s24
        %s170 = smul.u32 2, %s25
        %s171 = smul.u32 4, %s24
        %v172 = vld [vmem:[%s149] sm:$0xff]
        %v173 = vld [vmem:[%s149 + $0x8] sm:$0xff]
        %v174 = vld [vmem:[%s149 + $0x10] sm:$0xff]
        %v175 = vld [vmem:[%s149 + $0x18] sm:$0xff]
        %v176 = vld [vmem:[%s149 + $0x20] sm:$0xff]
        %v177 = vld [vmem:[%s149 + $0x28] sm:$0xff]
        %v178 = vld [vmem:[%s149 + $0x30] sm:$0xff]
        %v179 = vld [vmem:[%s149 + $0x38] sm:$0xff]
        %v188 = vrot.slane %v172, 2
        %v189 = vrot.slane %v172, 4
        %v190 = vrot.slane %v172, 6
        %v191 = vrot.slane %v173, 2
        %v192 = vrot.slane %v173, 4
        %v193 = vrot.slane %v173, 6
        %v194 = vrot.slane %v174, 2
        %v195 = vrot.slane %v174, 4
        %v196 = vrot.slane %v174, 6
        %v197 = vrot.slane %v175, 2
        %v198 = vrot.slane %v175, 4
        %v199 = vrot.slane %v175, 6
        %v200 = vrot.slane %v176, 2
        %v201 = vrot.slane %v176, 4
        %v202 = vrot.slane %v176, 6
        %v203 = vrot.slane %v177, 2
        %v204 = vrot.slane %v177, 4
        %v205 = vrot.slane %v177, 6
        %v206 = vrot.slane %v178, 2
        %v207 = vrot.slane %v178, 4
        %v208 = vrot.slane %v178, 6
        %v209 = vrot.slane %v179, 2
        %v210 = vrot.slane %v179, 4
        %v211 = vrot.slane %v179, 6
        %v236 = vrot.slane %v172, 7
        %v237 = vrot.slane %v236, 2
        %v238 = vrot.slane %v188, 7
        %v239 = vrot.slane %v238, 2
        %v240 = vrot.slane %v189, 7
        %v241 = vrot.slane %v240, 2
        %v242 = vrot.slane %v190, 7
        %v243 = vrot.slane %v242, 2
        %v244 = vrot.slane %v173, 7
        %v245 = vrot.slane %v244, 2
        %v246 = vrot.slane %v191, 7
        %v247 = vrot.slane %v246, 2
        %v248 = vrot.slane %v192, 7
        %v249 = vrot.slane %v248, 2
        %v250 = vrot.slane %v193, 7
        %v251 = vrot.slane %v250, 2
        %v252 = vrot.slane %v174, 7
        %v253 = vrot.slane %v252, 2
        %v254 = vrot.slane %v194, 7
        %v255 = vrot.slane %v254, 2
        %v256 = vrot.slane %v195, 7
        %v257 = vrot.slane %v256, 2
        %v258 = vrot.slane %v196, 7
        %v259 = vrot.slane %v258, 2
        %v260 = vrot.slane %v175, 7
        %v261 = vrot.slane %v260, 2
        %v262 = vrot.slane %v197, 7
        %v263 = vrot.slane %v262, 2
        %v264 = vrot.slane %v198, 7
        %v265 = vrot.slane %v264, 2
        %v266 = vrot.slane %v199, 7
        %v267 = vrot.slane %v266, 2
        %v268 = vrot.slane %v176, 7
        %v269 = vrot.slane %v268, 2
        %v270 = vrot.slane %v200, 7
        %v271 = vrot.slane %v270, 2
        %v272 = vrot.slane %v201, 7
        %v273 = vrot.slane %v272, 2
        %v274 = vrot.slane %v202, 7
        %v275 = vrot.slane %v274, 2
        %v276 = vrot.slane %v177, 7
        %v277 = vrot.slane %v276, 2
        %v278 = vrot.slane %v203, 7
        %v279 = vrot.slane %v278, 2
        %v280 = vrot.slane %v204, 7
        %v281 = vrot.slane %v280, 2
        %v282 = vrot.slane %v205, 7
        %v283 = vrot.slane %v282, 2
        %v284 = vrot.slane %v178, 7
        %v285 = vrot.slane %v284, 2
        %v286 = vrot.slane %v206, 7
        %v287 = vrot.slane %v286, 2
        %v288 = vrot.slane %v207, 7
        %v289 = vrot.slane %v288, 2
        %v290 = vrot.slane %v208, 7
        %v291 = vrot.slane %v290, 2
        %v292 = vrot.slane %v179, 7
        %v293 = vrot.slane %v292, 2
        %v294 = vrot.slane %v209, 7
        %v295 = vrot.slane %v294, 2
        %v296 = vrot.slane %v210, 7
        %v297 = vrot.slane %v296, 2
        %v298 = vrot.slane %v211, 7
        %v299 = vrot.slane %v298, 2
        %v332 = vadd.f32 %v172, %v237
        %v333 = vadd.f32 %v188, %v239
        %v334 = vadd.f32 %v189, %v241
        %v335 = vadd.f32 %v190, %v243
        %v336 = vadd.f32 %v173, %v245
        %v337 = vadd.f32 %v191, %v247
        %v338 = vadd.f32 %v192, %v249
        %v339 = vadd.f32 %v193, %v251
        %v340 = vadd.f32 %v174, %v253
        %v341 = vadd.f32 %v194, %v255
        %v342 = vadd.f32 %v195, %v257
        %v343 = vadd.f32 %v196, %v259
        %v344 = vadd.f32 %v175, %v261
        %v345 = vadd.f32 %v197, %v263
        %v346 = vadd.f32 %v198, %v265
        %v347 = vadd.f32 %v199, %v267
        %v348 = vadd.f32 %v176, %v269
        %v349 = vadd.f32 %v200, %v271
        %v350 = vadd.f32 %v201, %v273
        %v351 = vadd.f32 %v202, %v275
        %v352 = vadd.f32 %v177, %v277
        %v353 = vadd.f32 %v203, %v279
        %v354 = vadd.f32 %v204, %v281
        %v355 = vadd.f32 %v205, %v283
        %v356 = vadd.f32 %v178, %v285
        %v357 = vadd.f32 %v206, %v287
        %v358 = vadd.f32 %v207, %v289
        %v359 = vadd.f32 %v208, %v291
        %v360 = vadd.f32 %v179, %v293
        %v361 = vadd.f32 %v209, %v295
        %v362 = vadd.f32 %v210, %v297
        %v363 = vadd.f32 %v211, %v299
        %396 = vrot.lane.b32.xlu0 %v332, 126
        %v397 = vpop.permute.xlu0 %396
        %398 = vrot.lane.b32.xlu0 %v333, 126
        %v399 = vpop.permute.xlu0 %398
        %400 = vrot.lane.b32.xlu0 %v334, 126
        %v401 = vpop.permute.xlu0 %400
        %402 = vrot.lane.b32.xlu0 %v335, 126
        %v403 = vpop.permute.xlu0 %402
        %404 = vrot.lane.b32.xlu0 %v336, 126
        %v405 = vpop.permute.xlu0 %404
        %406 = vrot.lane.b32.xlu0 %v337, 126
        %v407 = vpop.permute.xlu0 %406
        %408 = vrot.lane.b32.xlu0 %v338, 126
        %v409 = vpop.permute.xlu0 %408
        %410 = vrot.lane.b32.xlu0 %v339, 126
        %v411 = vpop.permute.xlu0 %410
        %412 = vrot.lane.b32.xlu0 %v340, 126
        %v413 = vpop.permute.xlu0 %412
        %414 = vrot.lane.b32.xlu0 %v341, 126
        %v415 = vpop.permute.xlu0 %414
        %416 = vrot.lane.b32.xlu0 %v342, 126
        %v417 = vpop.permute.xlu0 %416
        %418 = vrot.lane.b32.xlu0 %v343, 126
        %v419 = vpop.permute.xlu0 %418
        %420 = vrot.lane.b32.xlu0 %v344, 126
        %v421 = vpop.permute.xlu0 %420
        %422 = vrot.lane.b32.xlu0 %v345, 126
        %v423 = vpop.permute.xlu0 %422
        %424 = vrot.lane.b32.xlu0 %v346, 126
        %v425 = vpop.permute.xlu0 %424
        %426 = vrot.lane.b32.xlu0 %v347, 126
        %v427 = vpop.permute.xlu0 %426
        %428 = vrot.lane.b32.xlu0 %v348, 126
        %v429 = vpop.permute.xlu0 %428
        %430 = vrot.lane.b32.xlu0 %v349, 126
        %v431 = vpop.permute.xlu0 %430
        %432 = vrot.lane.b32.xlu0 %v350, 126
        %v433 = vpop.permute.xlu0 %432
        %434 = vrot.lane.b32.xlu0 %v351, 126
        %v435 = vpop.permute.xlu0 %434
        %436 = vrot.lane.b32.xlu0 %v352, 126
        %v437 = vpop.permute.xlu0 %436
        %438 = vrot.lane.b32.xlu0 %v353, 126
        %v439 = vpop.permute.xlu0 %438
        %440 = vrot.lane.b32.xlu0 %v354, 126
        %v441 = vpop.permute.xlu0 %440
        %442 = vrot.lane.b32.xlu0 %v355, 126
        %v443 = vpop.permute.xlu0 %442
        %444 = vrot.lane.b32.xlu0 %v356, 126
        %v445 = vpop.permute.xlu0 %444
        %446 = vrot.lane.b32.xlu0 %v357, 126
        %v447 = vpop.permute.xlu0 %446
        %448 = vrot.lane.b32.xlu0 %v358, 126
        %v449 = vpop.permute.xlu0 %448
        %450 = vrot.lane.b32.xlu0 %v359, 126
        %v451 = vpop.permute.xlu0 %450
        %452 = vrot.lane.b32.xlu0 %v360, 126
        %v453 = vpop.permute.xlu0 %452
        %454 = vrot.lane.b32.xlu0 %v361, 126
        %v455 = vpop.permute.xlu0 %454
        %456 = vrot.lane.b32.xlu0 %v362, 126
        %v457 = vpop.permute.xlu0 %456
        %458 = vrot.lane.b32.xlu0 %v363, 126
        %v459 = vpop.permute.xlu0 %458
        %460 = vrot.lane.b32.xlu0 %v332, 124
        %v461 = vpop.permute.xlu0 %460
        %462 = vrot.lane.b32.xlu0 %v333, 124
        %v463 = vpop.permute.xlu0 %462
        %464 = vrot.lane.b32.xlu0 %v334, 124
        %v465 = vpop.permute.xlu0 %464
        %466 = vrot.lane.b32.xlu0 %v335, 124
        %v467 = vpop.permute.xlu0 %466
        %468 = vrot.lane.b32.xlu0 %v336, 124
        %v469 = vpop.permute.xlu0 %468
        %470 = vrot.lane.b32.xlu0 %v337, 124
        %v471 = vpop.permute.xlu0 %470
        %472 = vrot.lane.b32.xlu0 %v338, 124
        %v473 = vpop.permute.xlu0 %472
        %474 = vrot.lane.b32.xlu0 %v339, 124
        %v475 = vpop.permute.xlu0 %474
        %476 = vrot.lane.b32.xlu0 %v340, 124
        %v477 = vpop.permute.xlu0 %476
        %478 = vrot.lane.b32.xlu0 %v341, 124
        %v479 = vpop.permute.xlu0 %478
        %480 = vrot.lane.b32.xlu0 %v342, 124
        %v481 = vpop.permute.xlu0 %480
        %482 = vrot.lane.b32.xlu0 %v343, 124
        %v483 = vpop.permute.xlu0 %482
        %484 = vrot.lane.b32.xlu0 %v344, 124
        %v485 = vpop.permute.xlu0 %484
        %486 = vrot.lane.b32.xlu0 %v345, 124
        %v487 = vpop.permute.xlu0 %486
        %488 = vrot.lane.b32.xlu0 %v346, 124
        %v489 = vpop.permute.xlu0 %488
        %490 = vrot.lane.b32.xlu0 %v347, 124
        %v491 = vpop.permute.xlu0 %490
        %492 = vrot.lane.b32.xlu0 %v348, 124
        %v493 = vpop.permute.xlu0 %492
        %494 = vrot.lane.b32.xlu0 %v349, 124
        %v495 = vpop.permute.xlu0 %494
        %496 = vrot.lane.b32.xlu0 %v350, 124
        %v497 = vpop.permute.xlu0 %496
        %498 = vrot.lane.b32.xlu0 %v351, 124
        %v499 = vpop.permute.xlu0 %498
        %500 = vrot.lane.b32.xlu0 %v352, 124
        %v501 = vpop.permute.xlu0 %500
        %502 = vrot.lane.b32.xlu0 %v353, 124
        %v503 = vpop.permute.xlu0 %502
        %504 = vrot.lane.b32.xlu0 %v354, 124
        %v505 = vpop.permute.xlu0 %504
        %506 = vrot.lane.b32.xlu0 %v355, 124
        %v507 = vpop.permute.xlu0 %506
        %508 = vrot.lane.b32.xlu0 %v356, 124
        %v509 = vpop.permute.xlu0 %508
        %510 = vrot.lane.b32.xlu0 %v357, 124
        %v511 = vpop.permute.xlu0 %510
        %512 = vrot.lane.b32.xlu0 %v358, 124
        %v513 = vpop.permute.xlu0 %512
        %514 = vrot.lane.b32.xlu0 %v359, 124
        %v515 = vpop.permute.xlu0 %514
        %516 = vrot.lane.b32.xlu0 %v360, 124
        %v517 = vpop.permute.xlu0 %516
        %518 = vrot.lane.b32.xlu0 %v361, 124
        %v519 = vpop.permute.xlu0 %518
        %520 = vrot.lane.b32.xlu0 %v362, 124
        %v521 = vpop.permute.xlu0 %520
        %522 = vrot.lane.b32.xlu0 %v363, 124
        %v523 = vpop.permute.xlu0 %522
        %524 = vrot.lane.b32.xlu0 %v332, 122
        %v525 = vpop.permute.xlu0 %524
        %526 = vrot.lane.b32.xlu0 %v333, 122
        %v527 = vpop.permute.xlu0 %526
        %528 = vrot.lane.b32.xlu0 %v334, 122
        %v529 = vpop.permute.xlu0 %528
        %530 = vrot.lane.b32.xlu0 %v335, 122
        %v531 = vpop.permute.xlu0 %530
        %532 = vrot.lane.b32.xlu0 %v336, 122
        %v533 = vpop.permute.xlu0 %532
        %534 = vrot.lane.b32.xlu0 %v337, 122
        %v535 = vpop.permute.xlu0 %534
        %536 = vrot.lane.b32.xlu0 %v338, 122
        %v537 = vpop.permute.xlu0 %536
        %538 = vrot.lane.b32.xlu0 %v339, 122
        %v539 = vpop.permute.xlu0 %538
        %540 = vrot.lane.b32.xlu0 %v340, 122
        %v541 = vpop.permute.xlu0 %540
        %542 = vrot.lane.b32.xlu0 %v341, 122
        %v543 = vpop.permute.xlu0 %542
        %544 = vrot.lane.b32.xlu0 %v342, 122
        %v545 = vpop.permute.xlu0 %544
        %546 = vrot.lane.b32.xlu0 %v343, 122
        %v547 = vpop.permute.xlu0 %546
        %548 = vrot.lane.b32.xlu0 %v344, 122
        %v549 = vpop.permute.xlu0 %548
        %550 = vrot.lane.b32.xlu0 %v345, 122
        %v551 = vpop.permute.xlu0 %550
        %552 = vrot.lane.b32.xlu0 %v346, 122
        %v553 = vpop.permute.xlu0 %552
        %554 = vrot.lane.b32.xlu0 %v347, 122
        %v555 = vpop.permute.xlu0 %554
        %556 = vrot.lane.b32.xlu0 %v348, 122
        %v557 = vpop.permute.xlu0 %556
        %558 = vrot.lane.b32.xlu0 %v349, 122
        %v559 = vpop.permute.xlu0 %558
        %560 = vrot.lane.b32.xlu0 %v350, 122
        %v561 = vpop.permute.xlu0 %560
        %562 = vrot.lane.b32.xlu0 %v351, 122
        %v563 = vpop.permute.xlu0 %562
        %564 = vrot.lane.b32.xlu0 %v352, 122
        %v565 = vpop.permute.xlu0 %564
        %566 = vrot.lane.b32.xlu0 %v353, 122
        %v567 = vpop.permute.xlu0 %566
        %568 = vrot.lane.b32.xlu0 %v354, 122
        %v569 = vpop.permute.xlu0 %568
        %570 = vrot.lane.b32.xlu0 %v355, 122
        %v571 = vpop.permute.xlu0 %570
        %572 = vrot.lane.b32.xlu0 %v356, 122
        %v573 = vpop.permute.xlu0 %572
        %574 = vrot.lane.b32.xlu0 %v357, 122
        %v575 = vpop.permute.xlu0 %574
        %576 = vrot.lane.b32.xlu0 %v358, 122
        %v577 = vpop.permute.xlu0 %576
        %578 = vrot.lane.b32.xlu0 %v359, 122
        %v579 = vpop.permute.xlu0 %578
        %580 = vrot.lane.b32.xlu0 %v360, 122
        %v581 = vpop.permute.xlu0 %580
        %582 = vrot.lane.b32.xlu0 %v361, 122
        %v583 = vpop.permute.xlu0 %582
        %584 = vrot.lane.b32.xlu0 %v362, 122
        %v585 = vpop.permute.xlu0 %584
        %586 = vrot.lane.b32.xlu0 %v363, 122
        %v587 = vpop.permute.xlu0 %586
        %588 = vrot.lane.b32.xlu0 %v332, 120
        %v589 = vpop.permute.xlu0 %588
        %590 = vrot.lane.b32.xlu0 %v333, 120
        %v591 = vpop.permute.xlu0 %590
        %592 = vrot.lane.b32.xlu0 %v334, 120
        %v593 = vpop.permute.xlu0 %592
        %594 = vrot.lane.b32.xlu0 %v335, 120
        %v595 = vpop.permute.xlu0 %594
        %596 = vrot.lane.b32.xlu0 %v336, 120
        %v597 = vpop.permute.xlu0 %596
        %598 = vrot.lane.b32.xlu0 %v337, 120
        %v599 = vpop.permute.xlu0 %598
        %600 = vrot.lane.b32.xlu0 %v338, 120
        %v601 = vpop.permute.xlu0 %600
        %602 = vrot.lane.b32.xlu0 %v339, 120
        %v603 = vpop.permute.xlu0 %602
        %604 = vrot.lane.b32.xlu0 %v340, 120
        %v605 = vpop.permute.xlu0 %604
        %606 = vrot.lane.b32.xlu0 %v341, 120
        %v607 = vpop.permute.xlu0 %606
        %608 = vrot.lane.b32.xlu0 %v342, 120
        %v609 = vpop.permute.xlu0 %608
        %610 = vrot.lane.b32.xlu0 %v343, 120
        %v611 = vpop.permute.xlu0 %610
        %612 = vrot.lane.b32.xlu0 %v344, 120
        %v613 = vpop.permute.xlu0 %612
        %614 = vrot.lane.b32.xlu0 %v345, 120
        %v615 = vpop.permute.xlu0 %614
        %616 = vrot.lane.b32.xlu0 %v346, 120
        %v617 = vpop.permute.xlu0 %616
        %618 = vrot.lane.b32.xlu0 %v347, 120
        %v619 = vpop.permute.xlu0 %618
        %620 = vrot.lane.b32.xlu0 %v348, 120
        %v621 = vpop.permute.xlu0 %620
        %622 = vrot.lane.b32.xlu0 %v349, 120
        %v623 = vpop.permute.xlu0 %622
        %624 = vrot.lane.b32.xlu0 %v350, 120
        %v625 = vpop.permute.xlu0 %624
        %626 = vrot.lane.b32.xlu0 %v351, 120
        %v627 = vpop.permute.xlu0 %626
        %628 = vrot.lane.b32.xlu0 %v352, 120
        %v629 = vpop.permute.xlu0 %628
        %630 = vrot.lane.b32.xlu0 %v353, 120
        %v631 = vpop.permute.xlu0 %630
        %632 = vrot.lane.b32.xlu0 %v354, 120
        %v633 = vpop.permute.xlu0 %632
        %634 = vrot.lane.b32.xlu0 %v355, 120
        %v635 = vpop.permute.xlu0 %634
        %636 = vrot.lane.b32.xlu0 %v356, 120
        %v637 = vpop.permute.xlu0 %636
        %638 = vrot.lane.b32.xlu0 %v357, 120
        %v639 = vpop.permute.xlu0 %638
        %640 = vrot.lane.b32.xlu0 %v358, 120
        %v641 = vpop.permute.xlu0 %640
        %642 = vrot.lane.b32.xlu0 %v359, 120
        %v643 = vpop.permute.xlu0 %642
        %644 = vrot.lane.b32.xlu0 %v360, 120
        %v645 = vpop.permute.xlu0 %644
        %646 = vrot.lane.b32.xlu0 %v361, 120
        %v647 = vpop.permute.xlu0 %646
        %648 = vrot.lane.b32.xlu0 %v362, 120
        %v649 = vpop.permute.xlu0 %648
        %650 = vrot.lane.b32.xlu0 %v363, 120
        %v651 = vpop.permute.xlu0 %650
        %652 = vrot.lane.b32.xlu0 %v332, 118
        %v653 = vpop.permute.xlu0 %652
        %654 = vrot.lane.b32.xlu0 %v333, 118
        %v655 = vpop.permute.xlu0 %654
        %656 = vrot.lane.b32.xlu0 %v334, 118
        %v657 = vpop.permute.xlu0 %656
        %658 = vrot.lane.b32.xlu0 %v335, 118
        %v659 = vpop.permute.xlu0 %658
        %660 = vrot.lane.b32.xlu0 %v336, 118
        %v661 = vpop.permute.xlu0 %660
        %662 = vrot.lane.b32.xlu0 %v337, 118
        %v663 = vpop.permute.xlu0 %662
        %664 = vrot.lane.b32.xlu0 %v338, 118
        %v665 = vpop.permute.xlu0 %664
        %666 = vrot.lane.b32.xlu0 %v339, 118
        %v667 = vpop.permute.xlu0 %666
        %668 = vrot.lane.b32.xlu0 %v340, 118
        %v669 = vpop.permute.xlu0 %668
        %670 = vrot.lane.b32.xlu0 %v341, 118
        %v671 = vpop.permute.xlu0 %670
        %672 = vrot.lane.b32.xlu0 %v342, 118
        %v673 = vpop.permute.xlu0 %672
        %674 = vrot.lane.b32.xlu0 %v343, 118
        %v675 = vpop.permute.xlu0 %674
        %676 = vrot.lane.b32.xlu0 %v344, 118
        %v677 = vpop.permute.xlu0 %676
        %678 = vrot.lane.b32.xlu0 %v345, 118
        %v679 = vpop.permute.xlu0 %678
        %680 = vrot.lane.b32.xlu0 %v346, 118
        %v681 = vpop.permute.xlu0 %680
        %682 = vrot.lane.b32.xlu0 %v347, 118
        %v683 = vpop.permute.xlu0 %682
        %684 = vrot.lane.b32.xlu0 %v348, 118
        %v685 = vpop.permute.xlu0 %684
        %686 = vrot.lane.b32.xlu0 %v349, 118
        %v687 = vpop.permute.xlu0 %686
        %688 = vrot.lane.b32.xlu0 %v350, 118
        %v689 = vpop.permute.xlu0 %688
        %690 = vrot.lane.b32.xlu0 %v351, 118
        %v691 = vpop.permute.xlu0 %690
        %692 = vrot.lane.b32.xlu0 %v352, 118
        %v693 = vpop.permute.xlu0 %692
        %694 = vrot.lane.b32.xlu0 %v353, 118
        %v695 = vpop.permute.xlu0 %694
        %696 = vrot.lane.b32.xlu0 %v354, 118
        %v697 = vpop.permute.xlu0 %696
        %698 = vrot.lane.b32.xlu0 %v355, 118
        %v699 = vpop.permute.xlu0 %698
        %700 = vrot.lane.b32.xlu0 %v356, 118
        %v701 = vpop.permute.xlu0 %700
        %702 = vrot.lane.b32.xlu0 %v357, 118
        %v703 = vpop.permute.xlu0 %702
        %704 = vrot.lane.b32.xlu0 %v358, 118
        %v705 = vpop.permute.xlu0 %704
        %706 = vrot.lane.b32.xlu0 %v359, 118
        %v707 = vpop.permute.xlu0 %706
        %708 = vrot.lane.b32.xlu0 %v360, 118
        %v709 = vpop.permute.xlu0 %708
        %710 = vrot.lane.b32.xlu0 %v361, 118
        %v711 = vpop.permute.xlu0 %710
        %712 = vrot.lane.b32.xlu0 %v362, 118
        %v713 = vpop.permute.xlu0 %712
        %714 = vrot.lane.b32.xlu0 %v363, 118
        %v715 = vpop.permute.xlu0 %714
        %716 = vrot.lane.b32.xlu0 %v332, 116
        %v717 = vpop.permute.xlu0 %716
        %718 = vrot.lane.b32.xlu0 %v333, 116
        %v719 = vpop.permute.xlu0 %718
        %720 = vrot.lane.b32.xlu0 %v334, 116
        %v721 = vpop.permute.xlu0 %720
        %722 = vrot.lane.b32.xlu0 %v335, 116
        %v723 = vpop.permute.xlu0 %722
        %724 = vrot.lane.b32.xlu0 %v336, 116
        %v725 = vpop.permute.xlu0 %724
        %726 = vrot.lane.b32.xlu0 %v337, 116
        %v727 = vpop.permute.xlu0 %726
        %728 = vrot.lane.b32.xlu0 %v338, 116
        %v729 = vpop.permute.xlu0 %728
        %730 = vrot.lane.b32.xlu0 %v339, 116
        %v731 = vpop.permute.xlu0 %730
        %732 = vrot.lane.b32.xlu0 %v340, 116
        %v733 = vpop.permute.xlu0 %732
        %734 = vrot.lane.b32.xlu0 %v341, 116
        %v735 = vpop.permute.xlu0 %734
        %736 = vrot.lane.b32.xlu0 %v342, 116
        %v737 = vpop.permute.xlu0 %736
        %738 = vrot.lane.b32.xlu0 %v343, 116
        %v739 = vpop.permute.xlu0 %738
        %740 = vrot.lane.b32.xlu0 %v344, 116
        %v741 = vpop.permute.xlu0 %740
        %742 = vrot.lane.b32.xlu0 %v345, 116
        %v743 = vpop.permute.xlu0 %742
        %744 = vrot.lane.b32.xlu0 %v346, 116
        %v745 = vpop.permute.xlu0 %744
        %746 = vrot.lane.b32.xlu0 %v347, 116
        %v747 = vpop.permute.xlu0 %746
        %748 = vrot.lane.b32.xlu0 %v348, 116
        %v749 = vpop.permute.xlu0 %748
        %750 = vrot.lane.b32.xlu0 %v349, 116
        %v751 = vpop.permute.xlu0 %750
        %752 = vrot.lane.b32.xlu0 %v350, 116
        %v753 = vpop.permute.xlu0 %752
        %754 = vrot.lane.b32.xlu0 %v351, 116
        %v755 = vpop.permute.xlu0 %754
        %756 = vrot.lane.b32.xlu0 %v352, 116
        %v757 = vpop.permute.xlu0 %756
        %758 = vrot.lane.b32.xlu0 %v353, 116
        %v759 = vpop.permute.xlu0 %758
        %760 = vrot.lane.b32.xlu0 %v354, 116
        %v761 = vpop.permute.xlu0 %760
        %762 = vrot.lane.b32.xlu0 %v355, 116
        %v763 = vpop.permute.xlu0 %762
        %764 = vrot.lane.b32.xlu0 %v356, 116
        %v765 = vpop.permute.xlu0 %764
        %766 = vrot.lane.b32.xlu0 %v357, 116
        %v767 = vpop.permute.xlu0 %766
        %768 = vrot.lane.b32.xlu0 %v358, 116
        %v769 = vpop.permute.xlu0 %768
        %770 = vrot.lane.b32.xlu0 %v359, 116
        %v771 = vpop.permute.xlu0 %770
        %772 = vrot.lane.b32.xlu0 %v360, 116
        %v773 = vpop.permute.xlu0 %772
        %774 = vrot.lane.b32.xlu0 %v361, 116
        %v775 = vpop.permute.xlu0 %774
        %776 = vrot.lane.b32.xlu0 %v362, 116
        %v777 = vpop.permute.xlu0 %776
        %778 = vrot.lane.b32.xlu0 %v363, 116
        %v779 = vpop.permute.xlu0 %778
        %780 = vrot.lane.b32.xlu0 %v332, 114
        %v781 = vpop.permute.xlu0 %780
        %782 = vrot.lane.b32.xlu0 %v333, 114
        %v783 = vpop.permute.xlu0 %782
        %784 = vrot.lane.b32.xlu0 %v334, 114
        %v785 = vpop.permute.xlu0 %784
        %786 = vrot.lane.b32.xlu0 %v335, 114
        %v787 = vpop.permute.xlu0 %786
        %788 = vrot.lane.b32.xlu0 %v336, 114
        %v789 = vpop.permute.xlu0 %788
        %790 = vrot.lane.b32.xlu0 %v337, 114
        %v791 = vpop.permute.xlu0 %790
        %792 = vrot.lane.b32.xlu0 %v338, 114
        %v793 = vpop.permute.xlu0 %792
        %794 = vrot.lane.b32.xlu0 %v339, 114
        %v795 = vpop.permute.xlu0 %794
        %796 = vrot.lane.b32.xlu0 %v340, 114
        %v797 = vpop.permute.xlu0 %796
        %798 = vrot.lane.b32.xlu0 %v341, 114
        %v799 = vpop.permute.xlu0 %798
        %800 = vrot.lane.b32.xlu0 %v342, 114
        %v801 = vpop.permute.xlu0 %800
        %802 = vrot.lane.b32.xlu0 %v343, 114
        %v803 = vpop.permute.xlu0 %802
        %804 = vrot.lane.b32.xlu0 %v344, 114
        %v805 = vpop.permute.xlu0 %804
        %806 = vrot.lane.b32.xlu0 %v345, 114
        %v807 = vpop.permute.xlu0 %806
        %808 = vrot.lane.b32.xlu0 %v346, 114
        %v809 = vpop.permute.xlu0 %808
        %810 = vrot.lane.b32.xlu0 %v347, 114
        %v811 = vpop.permute.xlu0 %810
        %812 = vrot.lane.b32.xlu0 %v348, 114
        %v813 = vpop.permute.xlu0 %812
        %814 = vrot.lane.b32.xlu0 %v349, 114
        %v815 = vpop.permute.xlu0 %814
        %816 = vrot.lane.b32.xlu0 %v350, 114
        %v817 = vpop.permute.xlu0 %816
        %818 = vrot.lane.b32.xlu0 %v351, 114
        %v819 = vpop.permute.xlu0 %818
        %820 = vrot.lane.b32.xlu0 %v352, 114
        %v821 = vpop.permute.xlu0 %820
        %822 = vrot.lane.b32.xlu0 %v353, 114
        %v823 = vpop.permute.xlu0 %822
        %824 = vrot.lane.b32.xlu0 %v354, 114
        %v825 = vpop.permute.xlu0 %824
        %826 = vrot.lane.b32.xlu0 %v355, 114
        %v827 = vpop.permute.xlu0 %826
        %828 = vrot.lane.b32.xlu0 %v356, 114
        %v829 = vpop.permute.xlu0 %828
        %830 = vrot.lane.b32.xlu0 %v357, 114
        %v831 = vpop.permute.xlu0 %830
        %832 = vrot.lane.b32.xlu0 %v358, 114
        %v833 = vpop.permute.xlu0 %832
        %834 = vrot.lane.b32.xlu0 %v359, 114
        %v835 = vpop.permute.xlu0 %834
        %836 = vrot.lane.b32.xlu0 %v360, 114
        %v837 = vpop.permute.xlu0 %836
        %838 = vrot.lane.b32.xlu0 %v361, 114
        %v839 = vpop.permute.xlu0 %838
        %840 = vrot.lane.b32.xlu0 %v362, 114
        %v841 = vpop.permute.xlu0 %840
        %842 = vrot.lane.b32.xlu0 %v363, 114
        %v843 = vpop.permute.xlu0 %842
        %vm844 = vcmask 1042434
        %vm845 = vcmask 1044484
        %v846 = vsel %vm845, %v332, %v332
        %vm847 = vcmask 1046534
        %v848 = vsel %vm847, %v332, %v846
        %v849 = vrot.slane %v333, 7
        %vm850 = vcmask 1041409
        %v851 = vsel %vm850, %v849, %v848
        %vm852 = vcmask 1043459
        %v853 = vsel %vm852, %v849, %v851
        %vm854 = vcmask 1045509
        %v855 = vsel %vm854, %v849, %v853
        %vm856 = vcmask 1047559
        %v857 = vsel %vm856, %v849, %v855
        %v858 = vsel %vm845, %v334, %v334
        %v859 = vsel %vm847, %v334, %v858
        %v860 = vrot.slane %v335, 7
        %v861 = vsel %vm850, %v860, %v859
        %v862 = vsel %vm852, %v860, %v861
        %v863 = vsel %vm854, %v860, %v862
        %v864 = vsel %vm856, %v860, %v863
        %v865 = vsel %vm845, %v336, %v336
        %v866 = vsel %vm847, %v336, %v865
        %v867 = vrot.slane %v337, 7
        %v868 = vsel %vm850, %v867, %v866
        %v869 = vsel %vm852, %v867, %v868
        %v870 = vsel %vm854, %v867, %v869
        %v871 = vsel %vm856, %v867, %v870
        %v872 = vsel %vm845, %v338, %v338
        %v873 = vsel %vm847, %v338, %v872
        %v874 = vrot.slane %v339, 7
        %v875 = vsel %vm850, %v874, %v873
        %v876 = vsel %vm852, %v874, %v875
        %v877 = vsel %vm854, %v874, %v876
        %v878 = vsel %vm856, %v874, %v877
        %v879 = vsel %vm845, %v397, %v397
        %v880 = vsel %vm847, %v397, %v879
        %v881 = vrot.slane %v399, 7
        %v882 = vsel %vm850, %v881, %v880
        %v883 = vsel %vm852, %v881, %v882
        %v884 = vsel %vm854, %v881, %v883
        %v885 = vsel %vm856, %v881, %v884
        %v886 = vsel %vm845, %v401, %v401
        %v887 = vsel %vm847, %v401, %v886
        %v888 = vrot.slane %v403, 7
        %v889 = vsel %vm850, %v888, %v887
        %v890 = vsel %vm852, %v888, %v889
        %v891 = vsel %vm854, %v888, %v890
        %v892 = vsel %vm856, %v888, %v891
        %v893 = vsel %vm845, %v405, %v405
        %v894 = vsel %vm847, %v405, %v893
        %v895 = vrot.slane %v407, 7
        %v896 = vsel %vm850, %v895, %v894
        %v897 = vsel %vm852, %v895, %v896
        %v898 = vsel %vm854, %v895, %v897
        %v899 = vsel %vm856, %v895, %v898
        %v900 = vsel %vm845, %v409, %v409
        %v901 = vsel %vm847, %v409, %v900
        %v902 = vrot.slane %v411, 7
        %v903 = vsel %vm850, %v902, %v901
        %v904 = vsel %vm852, %v902, %v903
        %v905 = vsel %vm854, %v902, %v904
        %v906 = vsel %vm856, %v902, %v905
        %v907 = vsel %vm845, %v461, %v461
        %v908 = vsel %vm847, %v461, %v907
        %v909 = vrot.slane %v463, 7
        %v910 = vsel %vm850, %v909, %v908
        %v911 = vsel %vm852, %v909, %v910
        %v912 = vsel %vm854, %v909, %v911
        %v913 = vsel %vm856, %v909, %v912
        %v914 = vsel %vm845, %v465, %v465
        %v915 = vsel %vm847, %v465, %v914
        %v916 = vrot.slane %v467, 7
        %v917 = vsel %vm850, %v916, %v915
        %v918 = vsel %vm852, %v916, %v917
        %v919 = vsel %vm854, %v916, %v918
        %v920 = vsel %vm856, %v916, %v919
        %v921 = vsel %vm845, %v469, %v469
        %v922 = vsel %vm847, %v469, %v921
        %v923 = vrot.slane %v471, 7
        %v924 = vsel %vm850, %v923, %v922
        %v925 = vsel %vm852, %v923, %v924
        %v926 = vsel %vm854, %v923, %v925
        %v927 = vsel %vm856, %v923, %v926
        %v928 = vsel %vm845, %v473, %v473
        %v929 = vsel %vm847, %v473, %v928
        %v930 = vrot.slane %v475, 7
        %v931 = vsel %vm850, %v930, %v929
        %v932 = vsel %vm852, %v930, %v931
        %v933 = vsel %vm854, %v930, %v932
        %v934 = vsel %vm856, %v930, %v933
        %v935 = vsel %vm845, %v525, %v525
        %v936 = vsel %vm847, %v525, %v935
        %v937 = vrot.slane %v527, 7
        %v938 = vsel %vm850, %v937, %v936
        %v939 = vsel %vm852, %v937, %v938
        %v940 = vsel %vm854, %v937, %v939
        %v941 = vsel %vm856, %v937, %v940
        %v942 = vsel %vm845, %v529, %v529
        %v943 = vsel %vm847, %v529, %v942
        %v944 = vrot.slane %v531, 7
        %v945 = vsel %vm850, %v944, %v943
        %v946 = vsel %vm852, %v944, %v945
        %v947 = vsel %vm854, %v944, %v946
        %v948 = vsel %vm856, %v944, %v947
        %v949 = vsel %vm845, %v533, %v533
        %v950 = vsel %vm847, %v533, %v949
        %v951 = vrot.slane %v535, 7
        %v952 = vsel %vm850, %v951, %v950
        %v953 = vsel %vm852, %v951, %v952
        %v954 = vsel %vm854, %v951, %v953
        %v955 = vsel %vm856, %v951, %v954
        %v956 = vsel %vm845, %v537, %v537
        %v957 = vsel %vm847, %v537, %v956
        %v958 = vrot.slane %v539, 7
        %v959 = vsel %vm850, %v958, %v957
        %v960 = vsel %vm852, %v958, %v959
        %v961 = vsel %vm854, %v958, %v960
        %v962 = vsel %vm856, %v958, %v961
        %v963 = vsel %vm845, %v589, %v589
        %v964 = vsel %vm847, %v589, %v963
        %v965 = vrot.slane %v591, 7
        %v966 = vsel %vm850, %v965, %v964
        %v967 = vsel %vm852, %v965, %v966
        %v968 = vsel %vm854, %v965, %v967
        %v969 = vsel %vm856, %v965, %v968
        %v970 = vsel %vm845, %v593, %v593
        %v971 = vsel %vm847, %v593, %v970
        %v972 = vrot.slane %v595, 7
        %v973 = vsel %vm850, %v972, %v971
        %v974 = vsel %vm852, %v972, %v973
        %v975 = vsel %vm854, %v972, %v974
        %v976 = vsel %vm856, %v972, %v975
        %v977 = vsel %vm845, %v597, %v597
        %v978 = vsel %vm847, %v597, %v977
        %v979 = vrot.slane %v599, 7
        %v980 = vsel %vm850, %v979, %v978
        %v981 = vsel %vm852, %v979, %v980
        %v982 = vsel %vm854, %v979, %v981
        %v983 = vsel %vm856, %v979, %v982
        %v984 = vsel %vm845, %v601, %v601
        %v985 = vsel %vm847, %v601, %v984
        %v986 = vrot.slane %v603, 7
        %v987 = vsel %vm850, %v986, %v985
        %v988 = vsel %vm852, %v986, %v987
        %v989 = vsel %vm854, %v986, %v988
        %v990 = vsel %vm856, %v986, %v989
        %v991 = vsel %vm845, %v653, %v653
        %v992 = vsel %vm847, %v653, %v991
        %v993 = vrot.slane %v655, 7
        %v994 = vsel %vm850, %v993, %v992
        %v995 = vsel %vm852, %v993, %v994
        %v996 = vsel %vm854, %v993, %v995
        %v997 = vsel %vm856, %v993, %v996
        %v998 = vsel %vm845, %v657, %v657
        %v999 = vsel %vm847, %v657, %v998
        %v1000 = vrot.slane %v659, 7
        %v1001 = vsel %vm850, %v1000, %v999
        %v1002 = vsel %vm852, %v1000, %v1001
        %v1003 = vsel %vm854, %v1000, %v1002
        %v1004 = vsel %vm856, %v1000, %v1003
        %v1005 = vsel %vm845, %v661, %v661
        %v1006 = vsel %vm847, %v661, %v1005
        %v1007 = vrot.slane %v663, 7
        %v1008 = vsel %vm850, %v1007, %v1006
        %v1009 = vsel %vm852, %v1007, %v1008
        %v1010 = vsel %vm854, %v1007, %v1009
        %v1011 = vsel %vm856, %v1007, %v1010
        %v1012 = vsel %vm845, %v665, %v665
        %v1013 = vsel %vm847, %v665, %v1012
        %v1014 = vrot.slane %v667, 7
        %v1015 = vsel %vm850, %v1014, %v1013
        %v1016 = vsel %vm852, %v1014, %v1015
        %v1017 = vsel %vm854, %v1014, %v1016
        %v1018 = vsel %vm856, %v1014, %v1017
        %v1019 = vsel %vm845, %v717, %v717
        %v1020 = vsel %vm847, %v717, %v1019
        %v1021 = vrot.slane %v719, 7
        %v1022 = vsel %vm850, %v1021, %v1020
        %v1023 = vsel %vm852, %v1021, %v1022
        %v1024 = vsel %vm854, %v1021, %v1023
        %v1025 = vsel %vm856, %v1021, %v1024
        %v1026 = vsel %vm845, %v721, %v721
        %v1027 = vsel %vm847, %v721, %v1026
        %v1028 = vrot.slane %v723, 7
        %v1029 = vsel %vm850, %v1028, %v1027
        %v1030 = vsel %vm852, %v1028, %v1029
        %v1031 = vsel %vm854, %v1028, %v1030
        %v1032 = vsel %vm856, %v1028, %v1031
        %v1033 = vsel %vm845, %v725, %v725
        %v1034 = vsel %vm847, %v725, %v1033
        %v1035 = vrot.slane %v727, 7
        %v1036 = vsel %vm850, %v1035, %v1034
        %v1037 = vsel %vm852, %v1035, %v1036
        %v1038 = vsel %vm854, %v1035, %v1037
        %v1039 = vsel %vm856, %v1035, %v1038
        %v1040 = vsel %vm845, %v729, %v729
        %v1041 = vsel %vm847, %v729, %v1040
        %v1042 = vrot.slane %v731, 7
        %v1043 = vsel %vm850, %v1042, %v1041
        %v1044 = vsel %vm852, %v1042, %v1043
        %v1045 = vsel %vm854, %v1042, %v1044
        %v1046 = vsel %vm856, %v1042, %v1045
        %v1047 = vsel %vm845, %v781, %v781
        %v1048 = vsel %vm847, %v781, %v1047
        %v1049 = vrot.slane %v783, 7
        %v1050 = vsel %vm850, %v1049, %v1048
        %v1051 = vsel %vm852, %v1049, %v1050
        %v1052 = vsel %vm854, %v1049, %v1051
        %v1053 = vsel %vm856, %v1049, %v1052
        %v1054 = vsel %vm845, %v785, %v785
        %v1055 = vsel %vm847, %v785, %v1054
        %v1056 = vrot.slane %v787, 7
        %v1057 = vsel %vm850, %v1056, %v1055
        %v1058 = vsel %vm852, %v1056, %v1057
        %v1059 = vsel %vm854, %v1056, %v1058
        %v1060 = vsel %vm856, %v1056, %v1059
        %v1061 = vsel %vm845, %v789, %v789
        %v1062 = vsel %vm847, %v789, %v1061
        %v1063 = vrot.slane %v791, 7
        %v1064 = vsel %vm850, %v1063, %v1062
        %v1065 = vsel %vm852, %v1063, %v1064
        %v1066 = vsel %vm854, %v1063, %v1065
        %v1067 = vsel %vm856, %v1063, %v1066
        %v1068 = vsel %vm845, %v793, %v793
        %v1069 = vsel %vm847, %v793, %v1068
        %v1070 = vrot.slane %v795, 7
        %v1071 = vsel %vm850, %v1070, %v1069
        %v1072 = vsel %vm852, %v1070, %v1071
        %v1073 = vsel %vm854, %v1070, %v1072
        %v1074 = vsel %vm856, %v1070, %v1073
        %v1075 = vsel %vm845, %v340, %v340
        %v1076 = vsel %vm847, %v340, %v1075
        %v1077 = vrot.slane %v341, 7
        %v1078 = vsel %vm850, %v1077, %v1076
        %v1079 = vsel %vm852, %v1077, %v1078
        %v1080 = vsel %vm854, %v1077, %v1079
        %v1081 = vsel %vm856, %v1077, %v1080
        %v1082 = vsel %vm845, %v342, %v342
        %v1083 = vsel %vm847, %v342, %v1082
        %v1084 = vrot.slane %v343, 7
        %v1085 = vsel %vm850, %v1084, %v1083
        %v1086 = vsel %vm852, %v1084, %v1085
        %v1087 = vsel %vm854, %v1084, %v1086
        %v1088 = vsel %vm856, %v1084, %v1087
        %v1089 = vsel %vm845, %v344, %v344
        %v1090 = vsel %vm847, %v344, %v1089
        %v1091 = vrot.slane %v345, 7
        %v1092 = vsel %vm850, %v1091, %v1090
        %v1093 = vsel %vm852, %v1091, %v1092
        %v1094 = vsel %vm854, %v1091, %v1093
        %v1095 = vsel %vm856, %v1091, %v1094
        %v1096 = vsel %vm845, %v346, %v346
        %v1097 = vsel %vm847, %v346, %v1096
        %v1098 = vrot.slane %v347, 7
        %v1099 = vsel %vm850, %v1098, %v1097
        %v1100 = vsel %vm852, %v1098, %v1099
        %v1101 = vsel %vm854, %v1098, %v1100
        %v1102 = vsel %vm856, %v1098, %v1101
        %v1103 = vsel %vm845, %v413, %v413
        %v1104 = vsel %vm847, %v413, %v1103
        %v1105 = vrot.slane %v415, 7
        %v1106 = vsel %vm850, %v1105, %v1104
        %v1107 = vsel %vm852, %v1105, %v1106
        %v1108 = vsel %vm854, %v1105, %v1107
        %v1109 = vsel %vm856, %v1105, %v1108
        %v1110 = vsel %vm845, %v417, %v417
        %v1111 = vsel %vm847, %v417, %v1110
        %v1112 = vrot.slane %v419, 7
        %v1113 = vsel %vm850, %v1112, %v1111
        %v1114 = vsel %vm852, %v1112, %v1113
        %v1115 = vsel %vm854, %v1112, %v1114
        %v1116 = vsel %vm856, %v1112, %v1115
        %v1117 = vsel %vm845, %v421, %v421
        %v1118 = vsel %vm847, %v421, %v1117
        %v1119 = vrot.slane %v423, 7
        %v1120 = vsel %vm850, %v1119, %v1118
        %v1121 = vsel %vm852, %v1119, %v1120
        %v1122 = vsel %vm854, %v1119, %v1121
        %v1123 = vsel %vm856, %v1119, %v1122
        %v1124 = vsel %vm845, %v425, %v425
        %v1125 = vsel %vm847, %v425, %v1124
        %v1126 = vrot.slane %v427, 7
        %v1127 = vsel %vm850, %v1126, %v1125
        %v1128 = vsel %vm852, %v1126, %v1127
        %v1129 = vsel %vm854, %v1126, %v1128
        %v1130 = vsel %vm856, %v1126, %v1129
        %v1131 = vsel %vm845, %v477, %v477
        %v1132 = vsel %vm847, %v477, %v1131
        %v1133 = vrot.slane %v479, 7
        %v1134 = vsel %vm850, %v1133, %v1132
        %v1135 = vsel %vm852, %v1133, %v1134
        %v1136 = vsel %vm854, %v1133, %v1135
        %v1137 = vsel %vm856, %v1133, %v1136
        %v1138 = vsel %vm845, %v481, %v481
        %v1139 = vsel %vm847, %v481, %v1138
        %v1140 = vrot.slane %v483, 7
        %v1141 = vsel %vm850, %v1140, %v1139
        %v1142 = vsel %vm852, %v1140, %v1141
        %v1143 = vsel %vm854, %v1140, %v1142
        %v1144 = vsel %vm856, %v1140, %v1143
        %v1145 = vsel %vm845, %v485, %v485
        %v1146 = vsel %vm847, %v485, %v1145
        %v1147 = vrot.slane %v487, 7
        %v1148 = vsel %vm850, %v1147, %v1146
        %v1149 = vsel %vm852, %v1147, %v1148
        %v1150 = vsel %vm854, %v1147, %v1149
        %v1151 = vsel %vm856, %v1147, %v1150
        %v1152 = vsel %vm845, %v489, %v489
        %v1153 = vsel %vm847, %v489, %v1152
        %v1154 = vrot.slane %v491, 7
        %v1155 = vsel %vm850, %v1154, %v1153
        %v1156 = vsel %vm852, %v1154, %v1155
        %v1157 = vsel %vm854, %v1154, %v1156
        %v1158 = vsel %vm856, %v1154, %v1157
        %v1159 = vsel %vm845, %v541, %v541
        %v1160 = vsel %vm847, %v541, %v1159
        %v1161 = vrot.slane %v543, 7
        %v1162 = vsel %vm850, %v1161, %v1160
        %v1163 = vsel %vm852, %v1161, %v1162
        %v1164 = vsel %vm854, %v1161, %v1163
        %v1165 = vsel %vm856, %v1161, %v1164
        %v1166 = vsel %vm845, %v545, %v545
        %v1167 = vsel %vm847, %v545, %v1166
        %v1168 = vrot.slane %v547, 7
        %v1169 = vsel %vm850, %v1168, %v1167
        %v1170 = vsel %vm852, %v1168, %v1169
        %v1171 = vsel %vm854, %v1168, %v1170
        %v1172 = vsel %vm856, %v1168, %v1171
        %v1173 = vsel %vm845, %v549, %v549
        %v1174 = vsel %vm847, %v549, %v1173
        %v1175 = vrot.slane %v551, 7
        %v1176 = vsel %vm850, %v1175, %v1174
        %v1177 = vsel %vm852, %v1175, %v1176
        %v1178 = vsel %vm854, %v1175, %v1177
        %v1179 = vsel %vm856, %v1175, %v1178
        %v1180 = vsel %vm845, %v553, %v553
        %v1181 = vsel %vm847, %v553, %v1180
        %v1182 = vrot.slane %v555, 7
        %v1183 = vsel %vm850, %v1182, %v1181
        %v1184 = vsel %vm852, %v1182, %v1183
        %v1185 = vsel %vm854, %v1182, %v1184
        %v1186 = vsel %vm856, %v1182, %v1185
        %v1187 = vsel %vm845, %v605, %v605
        %v1188 = vsel %vm847, %v605, %v1187
        %v1189 = vrot.slane %v607, 7
        %v1190 = vsel %vm850, %v1189, %v1188
        %v1191 = vsel %vm852, %v1189, %v1190
        %v1192 = vsel %vm854, %v1189, %v1191
        %v1193 = vsel %vm856, %v1189, %v1192
        %v1194 = vsel %vm845, %v609, %v609
        %v1195 = vsel %vm847, %v609, %v1194
        %v1196 = vrot.slane %v611, 7
        %v1197 = vsel %vm850, %v1196, %v1195
        %v1198 = vsel %vm852, %v1196, %v1197
        %v1199 = vsel %vm854, %v1196, %v1198
        %v1200 = vsel %vm856, %v1196, %v1199
        %v1201 = vsel %vm845, %v613, %v613
        %v1202 = vsel %vm847, %v613, %v1201
        %v1203 = vrot.slane %v615, 7
        %v1204 = vsel %vm850, %v1203, %v1202
        %v1205 = vsel %vm852, %v1203, %v1204
        %v1206 = vsel %vm854, %v1203, %v1205
        %v1207 = vsel %vm856, %v1203, %v1206
        %v1208 = vsel %vm845, %v617, %v617
        %v1209 = vsel %vm847, %v617, %v1208
        %v1210 = vrot.slane %v619, 7
        %v1211 = vsel %vm850, %v1210, %v1209
        %v1212 = vsel %vm852, %v1210, %v1211
        %v1213 = vsel %vm854, %v1210, %v1212
        %v1214 = vsel %vm856, %v1210, %v1213
        %v1215 = vsel %vm845, %v669, %v669
        %v1216 = vsel %vm847, %v669, %v1215
        %v1217 = vrot.slane %v671, 7
        %v1218 = vsel %vm850, %v1217, %v1216
        %v1219 = vsel %vm852, %v1217, %v1218
        %v1220 = vsel %vm854, %v1217, %v1219
        %v1221 = vsel %vm856, %v1217, %v1220
        %v1222 = vsel %vm845, %v673, %v673
        %v1223 = vsel %vm847, %v673, %v1222
        %v1224 = vrot.slane %v675, 7
        %v1225 = vsel %vm850, %v1224, %v1223
        %v1226 = vsel %vm852, %v1224, %v1225
        %v1227 = vsel %vm854, %v1224, %v1226
        %v1228 = vsel %vm856, %v1224, %v1227
        %v1229 = vsel %vm845, %v677, %v677
        %v1230 = vsel %vm847, %v677, %v1229
        %v1231 = vrot.slane %v679, 7
        %v1232 = vsel %vm850, %v1231, %v1230
        %v1233 = vsel %vm852, %v1231, %v1232
        %v1234 = vsel %vm854, %v1231, %v1233
        %v1235 = vsel %vm856, %v1231, %v1234
        %v1236 = vsel %vm845, %v681, %v681
        %v1237 = vsel %vm847, %v681, %v1236
        %v1238 = vrot.slane %v683, 7
        %v1239 = vsel %vm850, %v1238, %v1237
        %v1240 = vsel %vm852, %v1238, %v1239
        %v1241 = vsel %vm854, %v1238, %v1240
        %v1242 = vsel %vm856, %v1238, %v1241
        %v1243 = vsel %vm845, %v733, %v733
        %v1244 = vsel %vm847, %v733, %v1243
        %v1245 = vrot.slane %v735, 7
        %v1246 = vsel %vm850, %v1245, %v1244
        %v1247 = vsel %vm852, %v1245, %v1246
        %v1248 = vsel %vm854, %v1245, %v1247
        %v1249 = vsel %vm856, %v1245, %v1248
        %v1250 = vsel %vm845, %v737, %v737
        %v1251 = vsel %vm847, %v737, %v1250
        %v1252 = vrot.slane %v739, 7
        %v1253 = vsel %vm850, %v1252, %v1251
        %v1254 = vsel %vm852, %v1252, %v1253
        %v1255 = vsel %vm854, %v1252, %v1254
        %v1256 = vsel %vm856, %v1252, %v1255
        %v1257 = vsel %vm845, %v741, %v741
        %v1258 = vsel %vm847, %v741, %v1257
        %v1259 = vrot.slane %v743, 7
        %v1260 = vsel %vm850, %v1259, %v1258
        %v1261 = vsel %vm852, %v1259, %v1260
        %v1262 = vsel %vm854, %v1259, %v1261
        %v1263 = vsel %vm856, %v1259, %v1262
        %v1264 = vsel %vm845, %v745, %v745
        %v1265 = vsel %vm847, %v745, %v1264
        %v1266 = vrot.slane %v747, 7
        %v1267 = vsel %vm850, %v1266, %v1265
        %v1268 = vsel %vm852, %v1266, %v1267
        %v1269 = vsel %vm854, %v1266, %v1268
        %v1270 = vsel %vm856, %v1266, %v1269
        %v1271 = vsel %vm845, %v797, %v797
        %v1272 = vsel %vm847, %v797, %v1271
        %v1273 = vrot.slane %v799, 7
        %v1274 = vsel %vm850, %v1273, %v1272
        %v1275 = vsel %vm852, %v1273, %v1274
        %v1276 = vsel %vm854, %v1273, %v1275
        %v1277 = vsel %vm856, %v1273, %v1276
        %v1278 = vsel %vm845, %v801, %v801
        %v1279 = vsel %vm847, %v801, %v1278
        %v1280 = vrot.slane %v803, 7
        %v1281 = vsel %vm850, %v1280, %v1279
        %v1282 = vsel %vm852, %v1280, %v1281
        %v1283 = vsel %vm854, %v1280, %v1282
        %v1284 = vsel %vm856, %v1280, %v1283
        %v1285 = vsel %vm845, %v805, %v805
        %v1286 = vsel %vm847, %v805, %v1285
        %v1287 = vrot.slane %v807, 7
        %v1288 = vsel %vm850, %v1287, %v1286
        %v1289 = vsel %vm852, %v1287, %v1288
        %v1290 = vsel %vm854, %v1287, %v1289
        %v1291 = vsel %vm856, %v1287, %v1290
        %v1292 = vsel %vm845, %v809, %v809
        %v1293 = vsel %vm847, %v809, %v1292
        %v1294 = vrot.slane %v811, 7
        %v1295 = vsel %vm850, %v1294, %v1293
        %v1296 = vsel %vm852, %v1294, %v1295
        %v1297 = vsel %vm854, %v1294, %v1296
        %v1298 = vsel %vm856, %v1294, %v1297
        %v1299 = vsel %vm845, %v348, %v348
        %v1300 = vsel %vm847, %v348, %v1299
        %v1301 = vrot.slane %v349, 7
        %v1302 = vsel %vm850, %v1301, %v1300
        %v1303 = vsel %vm852, %v1301, %v1302
        %v1304 = vsel %vm854, %v1301, %v1303
        %v1305 = vsel %vm856, %v1301, %v1304
        %v1306 = vsel %vm845, %v350, %v350
        %v1307 = vsel %vm847, %v350, %v1306
        %v1308 = vrot.slane %v351, 7
        %v1309 = vsel %vm850, %v1308, %v1307
        %v1310 = vsel %vm852, %v1308, %v1309
        %v1311 = vsel %vm854, %v1308, %v1310
        %v1312 = vsel %vm856, %v1308, %v1311
        %v1313 = vsel %vm845, %v352, %v352
        %v1314 = vsel %vm847, %v352, %v1313
        %v1315 = vrot.slane %v353, 7
        %v1316 = vsel %vm850, %v1315, %v1314
        %v1317 = vsel %vm852, %v1315, %v1316
        %v1318 = vsel %vm854, %v1315, %v1317
        %v1319 = vsel %vm856, %v1315, %v1318
        %v1320 = vsel %vm845, %v354, %v354
        %v1321 = vsel %vm847, %v354, %v1320
        %v1322 = vrot.slane %v355, 7
        %v1323 = vsel %vm850, %v1322, %v1321
        %v1324 = vsel %vm852, %v1322, %v1323
        %v1325 = vsel %vm854, %v1322, %v1324
        %v1326 = vsel %vm856, %v1322, %v1325
        %v1327 = vsel %vm845, %v429, %v429
        %v1328 = vsel %vm847, %v429, %v1327
        %v1329 = vrot.slane %v431, 7
        %v1330 = vsel %vm850, %v1329, %v1328
        %v1331 = vsel %vm852, %v1329, %v1330
        %v1332 = vsel %vm854, %v1329, %v1331
        %v1333 = vsel %vm856, %v1329, %v1332
        %v1334 = vsel %vm845, %v433, %v433
        %v1335 = vsel %vm847, %v433, %v1334
        %v1336 = vrot.slane %v435, 7
        %v1337 = vsel %vm850, %v1336, %v1335
        %v1338 = vsel %vm852, %v1336, %v1337
        %v1339 = vsel %vm854, %v1336, %v1338
        %v1340 = vsel %vm856, %v1336, %v1339
        %v1341 = vsel %vm845, %v437, %v437
        %v1342 = vsel %vm847, %v437, %v1341
        %v1343 = vrot.slane %v439, 7
        %v1344 = vsel %vm850, %v1343, %v1342
        %v1345 = vsel %vm852, %v1343, %v1344
        %v1346 = vsel %vm854, %v1343, %v1345
        %v1347 = vsel %vm856, %v1343, %v1346
        %v1348 = vsel %vm845, %v441, %v441
        %v1349 = vsel %vm847, %v441, %v1348
        %v1350 = vrot.slane %v443, 7
        %v1351 = vsel %vm850, %v1350, %v1349
        %v1352 = vsel %vm852, %v1350, %v1351
        %v1353 = vsel %vm854, %v1350, %v1352
        %v1354 = vsel %vm856, %v1350, %v1353
        %v1355 = vsel %vm845, %v493, %v493
        %v1356 = vsel %vm847, %v493, %v1355
        %v1357 = vrot.slane %v495, 7
        %v1358 = vsel %vm850, %v1357, %v1356
        %v1359 = vsel %vm852, %v1357, %v1358
        %v1360 = vsel %vm854, %v1357, %v1359
        %v1361 = vsel %vm856, %v1357, %v1360
        %v1362 = vsel %vm845, %v497, %v497
        %v1363 = vsel %vm847, %v497, %v1362
        %v1364 = vrot.slane %v499, 7
        %v1365 = vsel %vm850, %v1364, %v1363
        %v1366 = vsel %vm852, %v1364, %v1365
        %v1367 = vsel %vm854, %v1364, %v1366
        %v1368 = vsel %vm856, %v1364, %v1367
        %v1369 = vsel %vm845, %v501, %v501
        %v1370 = vsel %vm847, %v501, %v1369
        %v1371 = vrot.slane %v503, 7
        %v1372 = vsel %vm850, %v1371, %v1370
        %v1373 = vsel %vm852, %v1371, %v1372
        %v1374 = vsel %vm854, %v1371, %v1373
        %v1375 = vsel %vm856, %v1371, %v1374
        %v1376 = vsel %vm845, %v505, %v505
        %v1377 = vsel %vm847, %v505, %v1376
        %v1378 = vrot.slane %v507, 7
        %v1379 = vsel %vm850, %v1378, %v1377
        %v1380 = vsel %vm852, %v1378, %v1379
        %v1381 = vsel %vm854, %v1378, %v1380
        %v1382 = vsel %vm856, %v1378, %v1381
        %v1383 = vsel %vm845, %v557, %v557
        %v1384 = vsel %vm847, %v557, %v1383
        %v1385 = vrot.slane %v559, 7
        %v1386 = vsel %vm850, %v1385, %v1384
        %v1387 = vsel %vm852, %v1385, %v1386
        %v1388 = vsel %vm854, %v1385, %v1387
        %v1389 = vsel %vm856, %v1385, %v1388
        %v1390 = vsel %vm845, %v561, %v561
        %v1391 = vsel %vm847, %v561, %v1390
        %v1392 = vrot.slane %v563, 7
        %v1393 = vsel %vm850, %v1392, %v1391
        %v1394 = vsel %vm852, %v1392, %v1393
        %v1395 = vsel %vm854, %v1392, %v1394
        %v1396 = vsel %vm856, %v1392, %v1395
        %v1397 = vsel %vm845, %v565, %v565
        %v1398 = vsel %vm847, %v565, %v1397
        %v1399 = vrot.slane %v567, 7
        %v1400 = vsel %vm850, %v1399, %v1398
        %v1401 = vsel %vm852, %v1399, %v1400
        %v1402 = vsel %vm854, %v1399, %v1401
        %v1403 = vsel %vm856, %v1399, %v1402
        %v1404 = vsel %vm845, %v569, %v569
        %v1405 = vsel %vm847, %v569, %v1404
        %v1406 = vrot.slane %v571, 7
        %v1407 = vsel %vm850, %v1406, %v1405
        %v1408 = vsel %vm852, %v1406, %v1407
        %v1409 = vsel %vm854, %v1406, %v1408
        %v1410 = vsel %vm856, %v1406, %v1409
        %v1411 = vsel %vm845, %v621, %v621
        %v1412 = vsel %vm847, %v621, %v1411
        %v1413 = vrot.slane %v623, 7
        %v1414 = vsel %vm850, %v1413, %v1412
        %v1415 = vsel %vm852, %v1413, %v1414
        %v1416 = vsel %vm854, %v1413, %v1415
        %v1417 = vsel %vm856, %v1413, %v1416
        %v1418 = vsel %vm845, %v625, %v625
        %v1419 = vsel %vm847, %v625, %v1418
        %v1420 = vrot.slane %v627, 7
        %v1421 = vsel %vm850, %v1420, %v1419
        %v1422 = vsel %vm852, %v1420, %v1421
        %v1423 = vsel %vm854, %v1420, %v1422
        %v1424 = vsel %vm856, %v1420, %v1423
        %v1425 = vsel %vm845, %v629, %v629
        %v1426 = vsel %vm847, %v629, %v1425
        %v1427 = vrot.slane %v631, 7
        %v1428 = vsel %vm850, %v1427, %v1426
        %v1429 = vsel %vm852, %v1427, %v1428
        %v1430 = vsel %vm854, %v1427, %v1429
        %v1431 = vsel %vm856, %v1427, %v1430
        %v1432 = vsel %vm845, %v633, %v633
        %v1433 = vsel %vm847, %v633, %v1432
        %v1434 = vrot.slane %v635, 7
        %v1435 = vsel %vm850, %v1434, %v1433
        %v1436 = vsel %vm852, %v1434, %v1435
        %v1437 = vsel %vm854, %v1434, %v1436
        %v1438 = vsel %vm856, %v1434, %v1437
        %v1439 = vsel %vm845, %v685, %v685
        %v1440 = vsel %vm847, %v685, %v1439
        %v1441 = vrot.slane %v687, 7
        %v1442 = vsel %vm850, %v1441, %v1440
        %v1443 = vsel %vm852, %v1441, %v1442
        %v1444 = vsel %vm854, %v1441, %v1443
        %v1445 = vsel %vm856, %v1441, %v1444
        %v1446 = vsel %vm845, %v689, %v689
        %v1447 = vsel %vm847, %v689, %v1446
        %v1448 = vrot.slane %v691, 7
        %v1449 = vsel %vm850, %v1448, %v1447
        %v1450 = vsel %vm852, %v1448, %v1449
        %v1451 = vsel %vm854, %v1448, %v1450
        %v1452 = vsel %vm856, %v1448, %v1451
        %v1453 = vsel %vm845, %v693, %v693
        %v1454 = vsel %vm847, %v693, %v1453
        %v1455 = vrot.slane %v695, 7
        %v1456 = vsel %vm850, %v1455, %v1454
        %v1457 = vsel %vm852, %v1455, %v1456
        %v1458 = vsel %vm854, %v1455, %v1457
        %v1459 = vsel %vm856, %v1455, %v1458
        %v1460 = vsel %vm845, %v697, %v697
        %v1461 = vsel %vm847, %v697, %v1460
        %v1462 = vrot.slane %v699, 7
        %v1463 = vsel %vm850, %v1462, %v1461
        %v1464 = vsel %vm852, %v1462, %v1463
        %v1465 = vsel %vm854, %v1462, %v1464
        %v1466 = vsel %vm856, %v1462, %v1465
        %v1467 = vsel %vm845, %v749, %v749
        %v1468 = vsel %vm847, %v749, %v1467
        %v1469 = vrot.slane %v751, 7
        %v1470 = vsel %vm850, %v1469, %v1468
        %v1471 = vsel %vm852, %v1469, %v1470
        %v1472 = vsel %vm854, %v1469, %v1471
        %v1473 = vsel %vm856, %v1469, %v1472
        %v1474 = vsel %vm845, %v753, %v753
        %v1475 = vsel %vm847, %v753, %v1474
        %v1476 = vrot.slane %v755, 7
        %v1477 = vsel %vm850, %v1476, %v1475
        %v1478 = vsel %vm852, %v1476, %v1477
        %v1479 = vsel %vm854, %v1476, %v1478
        %v1480 = vsel %vm856, %v1476, %v1479
        %v1481 = vsel %vm845, %v757, %v757
        %v1482 = vsel %vm847, %v757, %v1481
        %v1483 = vrot.slane %v759, 7
        %v1484 = vsel %vm850, %v1483, %v1482
        %v1485 = vsel %vm852, %v1483, %v1484
        %v1486 = vsel %vm854, %v1483, %v1485
        %v1487 = vsel %vm856, %v1483, %v1486
        %v1488 = vsel %vm845, %v761, %v761
        %v1489 = vsel %vm847, %v761, %v1488
        %v1490 = vrot.slane %v763, 7
        %v1491 = vsel %vm850, %v1490, %v1489
        %v1492 = vsel %vm852, %v1490, %v1491
        %v1493 = vsel %vm854, %v1490, %v1492
        %v1494 = vsel %vm856, %v1490, %v1493
        %v1495 = vsel %vm845, %v813, %v813
        %v1496 = vsel %vm847, %v813, %v1495
        %v1497 = vrot.slane %v815, 7
        %v1498 = vsel %vm850, %v1497, %v1496
        %v1499 = vsel %vm852, %v1497, %v1498
        %v1500 = vsel %vm854, %v1497, %v1499
        %v1501 = vsel %vm856, %v1497, %v1500
        %v1502 = vsel %vm845, %v817, %v817
        %v1503 = vsel %vm847, %v817, %v1502
        %v1504 = vrot.slane %v819, 7
        %v1505 = vsel %vm850, %v1504, %v1503
        %v1506 = vsel %vm852, %v1504, %v1505
        %v1507 = vsel %vm854, %v1504, %v1506
        %v1508 = vsel %vm856, %v1504, %v1507
        %v1509 = vsel %vm845, %v821, %v821
        %v1510 = vsel %vm847, %v821, %v1509
        %v1511 = vrot.slane %v823, 7
        %v1512 = vsel %vm850, %v1511, %v1510
        %v1513 = vsel %vm852, %v1511, %v1512
        %v1514 = vsel %vm854, %v1511, %v1513
        %v1515 = vsel %vm856, %v1511, %v1514
        %v1516 = vsel %vm845, %v825, %v825
        %v1517 = vsel %vm847, %v825, %v1516
        %v1518 = vrot.slane %v827, 7
        %v1519 = vsel %vm850, %v1518, %v1517
        %v1520 = vsel %vm852, %v1518, %v1519
        %v1521 = vsel %vm854, %v1518, %v1520
        %v1522 = vsel %vm856, %v1518, %v1521
        %v1523 = vsel %vm845, %v356, %v356
        %v1524 = vsel %vm847, %v356, %v1523
        %v1525 = vrot.slane %v357, 7
        %v1526 = vsel %vm850, %v1525, %v1524
        %v1527 = vsel %vm852, %v1525, %v1526
        %v1528 = vsel %vm854, %v1525, %v1527
        %v1529 = vsel %vm856, %v1525, %v1528
        %v1530 = vsel %vm845, %v358, %v358
        %v1531 = vsel %vm847, %v358, %v1530
        %v1532 = vrot.slane %v359, 7
        %v1533 = vsel %vm850, %v1532, %v1531
        %v1534 = vsel %vm852, %v1532, %v1533
        %v1535 = vsel %vm854, %v1532, %v1534
        %v1536 = vsel %vm856, %v1532, %v1535
        %v1537 = vsel %vm845, %v360, %v360
        %v1538 = vsel %vm847, %v360, %v1537
        %v1539 = vrot.slane %v361, 7
        %v1540 = vsel %vm850, %v1539, %v1538
        %v1541 = vsel %vm852, %v1539, %v1540
        %v1542 = vsel %vm854, %v1539, %v1541
        %v1543 = vsel %vm856, %v1539, %v1542
        %v1544 = vsel %vm845, %v362, %v362
        %v1545 = vsel %vm847, %v362, %v1544
        %v1546 = vrot.slane %v363, 7
        %v1547 = vsel %vm850, %v1546, %v1545
        %v1548 = vsel %vm852, %v1546, %v1547
        %v1549 = vsel %vm854, %v1546, %v1548
        %v1550 = vsel %vm856, %v1546, %v1549
        %v1551 = vsel %vm845, %v445, %v445
        %v1552 = vsel %vm847, %v445, %v1551
        %v1553 = vrot.slane %v447, 7
        %v1554 = vsel %vm850, %v1553, %v1552
        %v1555 = vsel %vm852, %v1553, %v1554
        %v1556 = vsel %vm854, %v1553, %v1555
        %v1557 = vsel %vm856, %v1553, %v1556
        %v1558 = vsel %vm845, %v449, %v449
        %v1559 = vsel %vm847, %v449, %v1558
        %v1560 = vrot.slane %v451, 7
        %v1561 = vsel %vm850, %v1560, %v1559
        %v1562 = vsel %vm852, %v1560, %v1561
        %v1563 = vsel %vm854, %v1560, %v1562
        %v1564 = vsel %vm856, %v1560, %v1563
        %v1565 = vsel %vm845, %v453, %v453
        %v1566 = vsel %vm847, %v453, %v1565
        %v1567 = vrot.slane %v455, 7
        %v1568 = vsel %vm850, %v1567, %v1566
        %v1569 = vsel %vm852, %v1567, %v1568
        %v1570 = vsel %vm854, %v1567, %v1569
        %v1571 = vsel %vm856, %v1567, %v1570
        %v1572 = vsel %vm845, %v457, %v457
        %v1573 = vsel %vm847, %v457, %v1572
        %v1574 = vrot.slane %v459, 7
        %v1575 = vsel %vm850, %v1574, %v1573
        %v1576 = vsel %vm852, %v1574, %v1575
        %v1577 = vsel %vm854, %v1574, %v1576
        %v1578 = vsel %vm856, %v1574, %v1577
        %v1579 = vsel %vm845, %v509, %v509
        %v1580 = vsel %vm847, %v509, %v1579
        %v1581 = vrot.slane %v511, 7
        %v1582 = vsel %vm850, %v1581, %v1580
        %v1583 = vsel %vm852, %v1581, %v1582
        %v1584 = vsel %vm854, %v1581, %v1583
        %v1585 = vsel %vm856, %v1581, %v1584
        %v1586 = vsel %vm845, %v513, %v513
        %v1587 = vsel %vm847, %v513, %v1586
        %v1588 = vrot.slane %v515, 7
        %v1589 = vsel %vm850, %v1588, %v1587
        %v1590 = vsel %vm852, %v1588, %v1589
        %v1591 = vsel %vm854, %v1588, %v1590
        %v1592 = vsel %vm856, %v1588, %v1591
        %v1593 = vsel %vm845, %v517, %v517
        %v1594 = vsel %vm847, %v517, %v1593
        %v1595 = vrot.slane %v519, 7
        %v1596 = vsel %vm850, %v1595, %v1594
        %v1597 = vsel %vm852, %v1595, %v1596
        %v1598 = vsel %vm854, %v1595, %v1597
        %v1599 = vsel %vm856, %v1595, %v1598
        %v1600 = vsel %vm845, %v521, %v521
        %v1601 = vsel %vm847, %v521, %v1600
        %v1602 = vrot.slane %v523, 7
        %v1603 = vsel %vm850, %v1602, %v1601
        %v1604 = vsel %vm852, %v1602, %v1603
        %v1605 = vsel %vm854, %v1602, %v1604
        %v1606 = vsel %vm856, %v1602, %v1605
        %v1607 = vsel %vm845, %v573, %v573
        %v1608 = vsel %vm847, %v573, %v1607
        %v1609 = vrot.slane %v575, 7
        %v1610 = vsel %vm850, %v1609, %v1608
        %v1611 = vsel %vm852, %v1609, %v1610
        %v1612 = vsel %vm854, %v1609, %v1611
        %v1613 = vsel %vm856, %v1609, %v1612
        %v1614 = vsel %vm845, %v577, %v577
        %v1615 = vsel %vm847, %v577, %v1614
        %v1616 = vrot.slane %v579, 7
        %v1617 = vsel %vm850, %v1616, %v1615
        %v1618 = vsel %vm852, %v1616, %v1617
        %v1619 = vsel %vm854, %v1616, %v1618
        %v1620 = vsel %vm856, %v1616, %v1619
        %v1621 = vsel %vm845, %v581, %v581
        %v1622 = vsel %vm847, %v581, %v1621
        %v1623 = vrot.slane %v583, 7
        %v1624 = vsel %vm850, %v1623, %v1622
        %v1625 = vsel %vm852, %v1623, %v1624
        %v1626 = vsel %vm854, %v1623, %v1625
        %v1627 = vsel %vm856, %v1623, %v1626
        %v1628 = vsel %vm845, %v585, %v585
        %v1629 = vsel %vm847, %v585, %v1628
        %v1630 = vrot.slane %v587, 7
        %v1631 = vsel %vm850, %v1630, %v1629
        %v1632 = vsel %vm852, %v1630, %v1631
        %v1633 = vsel %vm854, %v1630, %v1632
        %v1634 = vsel %vm856, %v1630, %v1633
        %v1635 = vsel %vm845, %v637, %v637
        %v1636 = vsel %vm847, %v637, %v1635
        %v1637 = vrot.slane %v639, 7
        %v1638 = vsel %vm850, %v1637, %v1636
        %v1639 = vsel %vm852, %v1637, %v1638
        %v1640 = vsel %vm854, %v1637, %v1639
        %v1641 = vsel %vm856, %v1637, %v1640
        %v1642 = vsel %vm845, %v641, %v641
        %v1643 = vsel %vm847, %v641, %v1642
        %v1644 = vrot.slane %v643, 7
        %v1645 = vsel %vm850, %v1644, %v1643
        %v1646 = vsel %vm852, %v1644, %v1645
        %v1647 = vsel %vm854, %v1644, %v1646
        %v1648 = vsel %vm856, %v1644, %v1647
        %v1649 = vsel %vm845, %v645, %v645
        %v1650 = vsel %vm847, %v645, %v1649
        %v1651 = vrot.slane %v647, 7
        %v1652 = vsel %vm850, %v1651, %v1650
        %v1653 = vsel %vm852, %v1651, %v1652
        %v1654 = vsel %vm854, %v1651, %v1653
        %v1655 = vsel %vm856, %v1651, %v1654
        %v1656 = vsel %vm845, %v649, %v649
        %v1657 = vsel %vm847, %v649, %v1656
        %v1658 = vrot.slane %v651, 7
        %v1659 = vsel %vm850, %v1658, %v1657
        %v1660 = vsel %vm852, %v1658, %v1659
        %v1661 = vsel %vm854, %v1658, %v1660
        %v1662 = vsel %vm856, %v1658, %v1661
        %v1663 = vsel %vm845, %v701, %v701
        %v1664 = vsel %vm847, %v701, %v1663
        %v1665 = vrot.slane %v703, 7
        %v1666 = vsel %vm850, %v1665, %v1664
        %v1667 = vsel %vm852, %v1665, %v1666
        %v1668 = vsel %vm854, %v1665, %v1667
        %v1669 = vsel %vm856, %v1665, %v1668
        %v1670 = vsel %vm845, %v705, %v705
        %v1671 = vsel %vm847, %v705, %v1670
        %v1672 = vrot.slane %v707, 7
        %v1673 = vsel %vm850, %v1672, %v1671
        %v1674 = vsel %vm852, %v1672, %v1673
        %v1675 = vsel %vm854, %v1672, %v1674
        %v1676 = vsel %vm856, %v1672, %v1675
        %v1677 = vsel %vm845, %v709, %v709
        %v1678 = vsel %vm847, %v709, %v1677
        %v1679 = vrot.slane %v711, 7
        %v1680 = vsel %vm850, %v1679, %v1678
        %v1681 = vsel %vm852, %v1679, %v1680
        %v1682 = vsel %vm854, %v1679, %v1681
        %v1683 = vsel %vm856, %v1679, %v1682
        %v1684 = vsel %vm845, %v713, %v713
        %v1685 = vsel %vm847, %v713, %v1684
        %v1686 = vrot.slane %v715, 7
        %v1687 = vsel %vm850, %v1686, %v1685
        %v1688 = vsel %vm852, %v1686, %v1687
        %v1689 = vsel %vm854, %v1686, %v1688
        %v1690 = vsel %vm856, %v1686, %v1689
        %v1691 = vsel %vm845, %v765, %v765
        %v1692 = vsel %vm847, %v765, %v1691
        %v1693 = vrot.slane %v767, 7
        %v1694 = vsel %vm850, %v1693, %v1692
        %v1695 = vsel %vm852, %v1693, %v1694
        %v1696 = vsel %vm854, %v1693, %v1695
        %v1697 = vsel %vm856, %v1693, %v1696
        %v1698 = vsel %vm845, %v769, %v769
        %v1699 = vsel %vm847, %v769, %v1698
        %v1700 = vrot.slane %v771, 7
        %v1701 = vsel %vm850, %v1700, %v1699
        %v1702 = vsel %vm852, %v1700, %v1701
        %v1703 = vsel %vm854, %v1700, %v1702
        %v1704 = vsel %vm856, %v1700, %v1703
        %v1705 = vsel %vm845, %v773, %v773
        %v1706 = vsel %vm847, %v773, %v1705
        %v1707 = vrot.slane %v775, 7
        %v1708 = vsel %vm850, %v1707, %v1706
        %v1709 = vsel %vm852, %v1707, %v1708
        %v1710 = vsel %vm854, %v1707, %v1709
        %v1711 = vsel %vm856, %v1707, %v1710
        %v1712 = vsel %vm845, %v777, %v777
        %v1713 = vsel %vm847, %v777, %v1712
        %v1714 = vrot.slane %v779, 7
        %v1715 = vsel %vm850, %v1714, %v1713
        %v1716 = vsel %vm852, %v1714, %v1715
        %v1717 = vsel %vm854, %v1714, %v1716
        %v1718 = vsel %vm856, %v1714, %v1717
        %v1719 = vsel %vm845, %v829, %v829
        %v1720 = vsel %vm847, %v829, %v1719
        %v1721 = vrot.slane %v831, 7
        %v1722 = vsel %vm850, %v1721, %v1720
        %v1723 = vsel %vm852, %v1721, %v1722
        %v1724 = vsel %vm854, %v1721, %v1723
        %v1725 = vsel %vm856, %v1721, %v1724
        %v1726 = vsel %vm845, %v833, %v833
        %v1727 = vsel %vm847, %v833, %v1726
        %v1728 = vrot.slane %v835, 7
        %v1729 = vsel %vm850, %v1728, %v1727
        %v1730 = vsel %vm852, %v1728, %v1729
        %v1731 = vsel %vm854, %v1728, %v1730
        %v1732 = vsel %vm856, %v1728, %v1731
        %v1733 = vsel %vm845, %v837, %v837
        %v1734 = vsel %vm847, %v837, %v1733
        %v1735 = vrot.slane %v839, 7
        %v1736 = vsel %vm850, %v1735, %v1734
        %v1737 = vsel %vm852, %v1735, %v1736
        %v1738 = vsel %vm854, %v1735, %v1737
        %v1739 = vsel %vm856, %v1735, %v1738
        %v1740 = vsel %vm845, %v841, %v841
        %v1741 = vsel %vm847, %v841, %v1740
        %v1742 = vrot.slane %v843, 7
        %v1743 = vsel %vm850, %v1742, %v1741
        %v1744 = vsel %vm852, %v1742, %v1743
        %v1745 = vsel %vm854, %v1742, %v1744
        %v1746 = vsel %vm856, %v1742, %v1745
        %v1875 = vrot.slane %v885, 4
        %vm1876 = vcmask 1047556
        %v1877 = vsel %vm1876, %v1875, %v857
        %v1879 = vunpack.c.l.s4 1934713408
        %v1880 = vunpack.c.0.s8 %v1879
        %v1881 = vperm.slane %v1877, %v1880
        %v1882 = vrot.slane %v1881, 4
        %v1883 = vsel %vm1876, 0.0, %v1882
        %v1884 = vrot.slane %v941, 4
        %v1885 = vsel %vm1876, %v1884, %v913
        %v1887 = vunpack.c.l.s4 1934713408
        %v1888 = vunpack.c.0.s8 %v1887
        %v1889 = vperm.slane %v1885, %v1888
        %v1890 = vrot.slane %v1889, 4
        %v1891 = vsel %vm1876, 0.0, %v1890
        %v1892 = vrot.slane %v997, 4
        %v1893 = vsel %vm1876, %v1892, %v969
        %v1895 = vunpack.c.l.s4 1934713408
        %v1896 = vunpack.c.0.s8 %v1895
        %v1897 = vperm.slane %v1893, %v1896
        %v1898 = vrot.slane %v1897, 4
        %v1899 = vsel %vm1876, 0.0, %v1898
        %v1900 = vrot.slane %v1053, 4
        %v1901 = vsel %vm1876, %v1900, %v1025
        %v1903 = vunpack.c.l.s4 1934713408
        %v1904 = vunpack.c.0.s8 %v1903
        %v1905 = vperm.slane %v1901, %v1904
        %v1906 = vrot.slane %v1905, 4
        %v1907 = vsel %vm1876, 0.0, %v1906
        %v1908 = vrot.slane %v892, 4
        %v1909 = vsel %vm1876, %v1908, %v864
        %v1911 = vunpack.c.l.s4 1934713408
        %v1912 = vunpack.c.0.s8 %v1911
        %v1913 = vperm.slane %v1909, %v1912
        %v1914 = vrot.slane %v1913, 4
        %v1915 = vsel %vm1876, 0.0, %v1914
        %v1916 = vrot.slane %v948, 4
        %v1917 = vsel %vm1876, %v1916, %v920
        %v1919 = vunpack.c.l.s4 1934713408
        %v1920 = vunpack.c.0.s8 %v1919
        %v1921 = vperm.slane %v1917, %v1920
        %v1922 = vrot.slane %v1921, 4
        %v1923 = vsel %vm1876, 0.0, %v1922
        %v1924 = vrot.slane %v1004, 4
        %v1925 = vsel %vm1876, %v1924, %v976
        %v1927 = vunpack.c.l.s4 1934713408
        %v1928 = vunpack.c.0.s8 %v1927
        %v1929 = vperm.slane %v1925, %v1928
        %v1930 = vrot.slane %v1929, 4
        %v1931 = vsel %vm1876, 0.0, %v1930
        %v1932 = vrot.slane %v1060, 4
        %v1933 = vsel %vm1876, %v1932, %v1032
        %v1935 = vunpack.c.l.s4 1934713408
        %v1936 = vunpack.c.0.s8 %v1935
        %v1937 = vperm.slane %v1933, %v1936
        %v1938 = vrot.slane %v1937, 4
        %v1939 = vsel %vm1876, 0.0, %v1938
        %v1940 = vrot.slane %v899, 4
        %v1941 = vsel %vm1876, %v1940, %v871
        %v1943 = vunpack.c.l.s4 1934713408
        %v1944 = vunpack.c.0.s8 %v1943
        %v1945 = vperm.slane %v1941, %v1944
        %v1946 = vrot.slane %v1945, 4
        %v1947 = vsel %vm1876, 0.0, %v1946
        %v1948 = vrot.slane %v955, 4
        %v1949 = vsel %vm1876, %v1948, %v927
        %v1951 = vunpack.c.l.s4 1934713408
        %v1952 = vunpack.c.0.s8 %v1951
        %v1953 = vperm.slane %v1949, %v1952
        %v1954 = vrot.slane %v1953, 4
        %v1955 = vsel %vm1876, 0.0, %v1954
        %v1956 = vrot.slane %v1011, 4
        %v1957 = vsel %vm1876, %v1956, %v983
        %v1959 = vunpack.c.l.s4 1934713408
        %v1960 = vunpack.c.0.s8 %v1959
        %v1961 = vperm.slane %v1957, %v1960
        %v1962 = vrot.slane %v1961, 4
        %v1963 = vsel %vm1876, 0.0, %v1962
        %v1964 = vrot.slane %v1067, 4
        %v1965 = vsel %vm1876, %v1964, %v1039
        %v1967 = vunpack.c.l.s4 1934713408
        %v1968 = vunpack.c.0.s8 %v1967
        %v1969 = vperm.slane %v1965, %v1968
        %v1970 = vrot.slane %v1969, 4
        %v1971 = vsel %vm1876, 0.0, %v1970
        %v1972 = vrot.slane %v906, 4
        %v1973 = vsel %vm1876, %v1972, %v878
        %v1975 = vunpack.c.l.s4 1934713408
        %v1976 = vunpack.c.0.s8 %v1975
        %v1977 = vperm.slane %v1973, %v1976
        %v1978 = vrot.slane %v1977, 4
        %v1979 = vsel %vm1876, 0.0, %v1978
        %v1980 = vrot.slane %v962, 4
        %v1981 = vsel %vm1876, %v1980, %v934
        %v1983 = vunpack.c.l.s4 1934713408
        %v1984 = vunpack.c.0.s8 %v1983
        %v1985 = vperm.slane %v1981, %v1984
        %v1986 = vrot.slane %v1985, 4
        %v1987 = vsel %vm1876, 0.0, %v1986
        %v1988 = vrot.slane %v1018, 4
        %v1989 = vsel %vm1876, %v1988, %v990
        %v1991 = vunpack.c.l.s4 1934713408
        %v1992 = vunpack.c.0.s8 %v1991
        %v1993 = vperm.slane %v1989, %v1992
        %v1994 = vrot.slane %v1993, 4
        %v1995 = vsel %vm1876, 0.0, %v1994
        %v1996 = vrot.slane %v1074, 4
        %v1997 = vsel %vm1876, %v1996, %v1046
        %v1999 = vunpack.c.l.s4 1934713408
        %v2000 = vunpack.c.0.s8 %v1999
        %v2001 = vperm.slane %v1997, %v2000
        %v2002 = vrot.slane %v2001, 4
        %v2003 = vsel %vm1876, 0.0, %v2002
        %v2004 = vrot.slane %v1109, 4
        %v2005 = vsel %vm1876, %v2004, %v1081
        %v2007 = vunpack.c.l.s4 1934713408
        %v2008 = vunpack.c.0.s8 %v2007
        %v2009 = vperm.slane %v2005, %v2008
        %v2010 = vrot.slane %v2009, 4
        %v2011 = vsel %vm1876, 0.0, %v2010
        %v2012 = vrot.slane %v1165, 4
        %v2013 = vsel %vm1876, %v2012, %v1137
        %v2015 = vunpack.c.l.s4 1934713408
        %v2016 = vunpack.c.0.s8 %v2015
        %v2017 = vperm.slane %v2013, %v2016
        %v2018 = vrot.slane %v2017, 4
        %v2019 = vsel %vm1876, 0.0, %v2018
        %v2020 = vrot.slane %v1221, 4
        %v2021 = vsel %vm1876, %v2020, %v1193
        %v2023 = vunpack.c.l.s4 1934713408
        %v2024 = vunpack.c.0.s8 %v2023
        %v2025 = vperm.slane %v2021, %v2024
        %v2026 = vrot.slane %v2025, 4
        %v2027 = vsel %vm1876, 0.0, %v2026
        %v2028 = vrot.slane %v1277, 4
        %v2029 = vsel %vm1876, %v2028, %v1249
        %v2031 = vunpack.c.l.s4 1934713408
        %v2032 = vunpack.c.0.s8 %v2031
        %v2033 = vperm.slane %v2029, %v2032
        %v2034 = vrot.slane %v2033, 4
        %v2035 = vsel %vm1876, 0.0, %v2034
        %v2036 = vrot.slane %v1116, 4
        %v2037 = vsel %vm1876, %v2036, %v1088
        %v2039 = vunpack.c.l.s4 1934713408
        %v2040 = vunpack.c.0.s8 %v2039
        %v2041 = vperm.slane %v2037, %v2040
        %v2042 = vrot.slane %v2041, 4
        %v2043 = vsel %vm1876, 0.0, %v2042
        %v2044 = vrot.slane %v1172, 4
        %v2045 = vsel %vm1876, %v2044, %v1144
        %v2047 = vunpack.c.l.s4 1934713408
        %v2048 = vunpack.c.0.s8 %v2047
        %v2049 = vperm.slane %v2045, %v2048
        %v2050 = vrot.slane %v2049, 4
        %v2051 = vsel %vm1876, 0.0, %v2050
        %v2052 = vrot.slane %v1228, 4
        %v2053 = vsel %vm1876, %v2052, %v1200
        %v2055 = vunpack.c.l.s4 1934713408
        %v2056 = vunpack.c.0.s8 %v2055
        %v2057 = vperm.slane %v2053, %v2056
        %v2058 = vrot.slane %v2057, 4
        %v2059 = vsel %vm1876, 0.0, %v2058
        %v2060 = vrot.slane %v1284, 4
        %v2061 = vsel %vm1876, %v2060, %v1256
        %v2063 = vunpack.c.l.s4 1934713408
        %v2064 = vunpack.c.0.s8 %v2063
        %v2065 = vperm.slane %v2061, %v2064
        %v2066 = vrot.slane %v2065, 4
        %v2067 = vsel %vm1876, 0.0, %v2066
        %v2068 = vrot.slane %v1123, 4
        %v2069 = vsel %vm1876, %v2068, %v1095
        %v2071 = vunpack.c.l.s4 1934713408
        %v2072 = vunpack.c.0.s8 %v2071
        %v2073 = vperm.slane %v2069, %v2072
        %v2074 = vrot.slane %v2073, 4
        %v2075 = vsel %vm1876, 0.0, %v2074
        %v2076 = vrot.slane %v1179, 4
        %v2077 = vsel %vm1876, %v2076, %v1151
        %v2079 = vunpack.c.l.s4 1934713408
        %v2080 = vunpack.c.0.s8 %v2079
        %v2081 = vperm.slane %v2077, %v2080
        %v2082 = vrot.slane %v2081, 4
        %v2083 = vsel %vm1876, 0.0, %v2082
        %v2084 = vrot.slane %v1235, 4
        %v2085 = vsel %vm1876, %v2084, %v1207
        %v2087 = vunpack.c.l.s4 1934713408
        %v2088 = vunpack.c.0.s8 %v2087
        %v2089 = vperm.slane %v2085, %v2088
        %v2090 = vrot.slane %v2089, 4
        %v2091 = vsel %vm1876, 0.0, %v2090
        %v2092 = vrot.slane %v1291, 4
        %v2093 = vsel %vm1876, %v2092, %v1263
        %v2095 = vunpack.c.l.s4 1934713408
        %v2096 = vunpack.c.0.s8 %v2095
        %v2097 = vperm.slane %v2093, %v2096
        %v2098 = vrot.slane %v2097, 4
        %v2099 = vsel %vm1876, 0.0, %v2098
        %v2100 = vrot.slane %v1130, 4
        %v2101 = vsel %vm1876, %v2100, %v1102
        %v2103 = vunpack.c.l.s4 1934713408
        %v2104 = vunpack.c.0.s8 %v2103
        %v2105 = vperm.slane %v2101, %v2104
        %v2106 = vrot.slane %v2105, 4
        %v2107 = vsel %vm1876, 0.0, %v2106
        %v2108 = vrot.slane %v1186, 4
        %v2109 = vsel %vm1876, %v2108, %v1158
        %v2111 = vunpack.c.l.s4 1934713408
        %v2112 = vunpack.c.0.s8 %v2111
        %v2113 = vperm.slane %v2109, %v2112
        %v2114 = vrot.slane %v2113, 4
        %v2115 = vsel %vm1876, 0.0, %v2114
        %v2116 = vrot.slane %v1242, 4
        %v2117 = vsel %vm1876, %v2116, %v1214
        %v2119 = vunpack.c.l.s4 1934713408
        %v2120 = vunpack.c.0.s8 %v2119
        %v2121 = vperm.slane %v2117, %v2120
        %v2122 = vrot.slane %v2121, 4
        %v2123 = vsel %vm1876, 0.0, %v2122
        %v2124 = vrot.slane %v1298, 4
        %v2125 = vsel %vm1876, %v2124, %v1270
        %v2127 = vunpack.c.l.s4 1934713408
        %v2128 = vunpack.c.0.s8 %v2127
        %v2129 = vperm.slane %v2125, %v2128
        %v2130 = vrot.slane %v2129, 4
        %v2131 = vsel %vm1876, 0.0, %v2130
        %v2132 = vrot.slane %v1333, 4
        %v2133 = vsel %vm1876, %v2132, %v1305
        %v2135 = vunpack.c.l.s4 1934713408
        %v2136 = vunpack.c.0.s8 %v2135
        %v2137 = vperm.slane %v2133, %v2136
        %v2138 = vrot.slane %v2137, 4
        %v2139 = vsel %vm1876, 0.0, %v2138
        %v2140 = vrot.slane %v1389, 4
        %v2141 = vsel %vm1876, %v2140, %v1361
        %v2143 = vunpack.c.l.s4 1934713408
        %v2144 = vunpack.c.0.s8 %v2143
        %v2145 = vperm.slane %v2141, %v2144
        %v2146 = vrot.slane %v2145, 4
        %v2147 = vsel %vm1876, 0.0, %v2146
        %v2148 = vrot.slane %v1445, 4
        %v2149 = vsel %vm1876, %v2148, %v1417
        %v2151 = vunpack.c.l.s4 1934713408
        %v2152 = vunpack.c.0.s8 %v2151
        %v2153 = vperm.slane %v2149, %v2152
        %v2154 = vrot.slane %v2153, 4
        %v2155 = vsel %vm1876, 0.0, %v2154
        %v2156 = vrot.slane %v1501, 4
        %v2157 = vsel %vm1876, %v2156, %v1473
        %v2159 = vunpack.c.l.s4 1934713408
        %v2160 = vunpack.c.0.s8 %v2159
        %v2161 = vperm.slane %v2157, %v2160
        %v2162 = vrot.slane %v2161, 4
        %v2163 = vsel %vm1876, 0.0, %v2162
        %v2164 = vrot.slane %v1340, 4
        %v2165 = vsel %vm1876, %v2164, %v1312
        %v2167 = vunpack.c.l.s4 1934713408
        %v2168 = vunpack.c.0.s8 %v2167
        %v2169 = vperm.slane %v2165, %v2168
        %v2170 = vrot.slane %v2169, 4
        %v2171 = vsel %vm1876, 0.0, %v2170
        %v2172 = vrot.slane %v1396, 4
        %v2173 = vsel %vm1876, %v2172, %v1368
        %v2175 = vunpack.c.l.s4 1934713408
        %v2176 = vunpack.c.0.s8 %v2175
        %v2177 = vperm.slane %v2173, %v2176
        %v2178 = vrot.slane %v2177, 4
        %v2179 = vsel %vm1876, 0.0, %v2178
        %v2180 = vrot.slane %v1452, 4
        %v2181 = vsel %vm1876, %v2180, %v1424
        %v2183 = vunpack.c.l.s4 1934713408
        %v2184 = vunpack.c.0.s8 %v2183
        %v2185 = vperm.slane %v2181, %v2184
        %v2186 = vrot.slane %v2185, 4
        %v2187 = vsel %vm1876, 0.0, %v2186
        %v2188 = vrot.slane %v1508, 4
        %v2189 = vsel %vm1876, %v2188, %v1480
        %v2191 = vunpack.c.l.s4 1934713408
        %v2192 = vunpack.c.0.s8 %v2191
        %v2193 = vperm.slane %v2189, %v2192
        %v2194 = vrot.slane %v2193, 4
        %v2195 = vsel %vm1876, 0.0, %v2194
        %v2196 = vrot.slane %v1347, 4
        %v2197 = vsel %vm1876, %v2196, %v1319
        %v2199 = vunpack.c.l.s4 1934713408
        %v2200 = vunpack.c.0.s8 %v2199
        %v2201 = vperm.slane %v2197, %v2200
        %v2202 = vrot.slane %v2201, 4
        %v2203 = vsel %vm1876, 0.0, %v2202
        %v2204 = vrot.slane %v1403, 4
        %v2205 = vsel %vm1876, %v2204, %v1375
        %v2207 = vunpack.c.l.s4 1934713408
        %v2208 = vunpack.c.0.s8 %v2207
        %v2209 = vperm.slane %v2205, %v2208
        %v2210 = vrot.slane %v2209, 4
        %v2211 = vsel %vm1876, 0.0, %v2210
        %v2212 = vrot.slane %v1459, 4
        %v2213 = vsel %vm1876, %v2212, %v1431
        %v2215 = vunpack.c.l.s4 1934713408
        %v2216 = vunpack.c.0.s8 %v2215
        %v2217 = vperm.slane %v2213, %v2216
        %v2218 = vrot.slane %v2217, 4
        %v2219 = vsel %vm1876, 0.0, %v2218
        %v2220 = vrot.slane %v1515, 4
        %v2221 = vsel %vm1876, %v2220, %v1487
        %v2223 = vunpack.c.l.s4 1934713408
        %v2224 = vunpack.c.0.s8 %v2223
        %v2225 = vperm.slane %v2221, %v2224
        %v2226 = vrot.slane %v2225, 4
        %v2227 = vsel %vm1876, 0.0, %v2226
        %v2228 = vrot.slane %v1354, 4
        %v2229 = vsel %vm1876, %v2228, %v1326
        %v2231 = vunpack.c.l.s4 1934713408
        %v2232 = vunpack.c.0.s8 %v2231
        %v2233 = vperm.slane %v2229, %v2232
        %v2234 = vrot.slane %v2233, 4
        %v2235 = vsel %vm1876, 0.0, %v2234
        %v2236 = vrot.slane %v1410, 4
        %v2237 = vsel %vm1876, %v2236, %v1382
        %v2239 = vunpack.c.l.s4 1934713408
        %v2240 = vunpack.c.0.s8 %v2239
        %v2241 = vperm.slane %v2237, %v2240
        %v2242 = vrot.slane %v2241, 4
        %v2243 = vsel %vm1876, 0.0, %v2242
        %v2244 = vrot.slane %v1466, 4
        %v2245 = vsel %vm1876, %v2244, %v1438
        %v2247 = vunpack.c.l.s4 1934713408
        %v2248 = vunpack.c.0.s8 %v2247
        %v2249 = vperm.slane %v2245, %v2248
        %v2250 = vrot.slane %v2249, 4
        %v2251 = vsel %vm1876, 0.0, %v2250
        %v2252 = vrot.slane %v1522, 4
        %v2253 = vsel %vm1876, %v2252, %v1494
        %v2255 = vunpack.c.l.s4 1934713408
        %v2256 = vunpack.c.0.s8 %v2255
        %v2257 = vperm.slane %v2253, %v2256
        %v2258 = vrot.slane %v2257, 4
        %v2259 = vsel %vm1876, 0.0, %v2258
        %v2260 = vrot.slane %v1557, 4
        %v2261 = vsel %vm1876, %v2260, %v1529
        %v2263 = vunpack.c.l.s4 1934713408
        %v2264 = vunpack.c.0.s8 %v2263
        %v2265 = vperm.slane %v2261, %v2264
        %v2266 = vrot.slane %v2265, 4
        %v2267 = vsel %vm1876, 0.0, %v2266
        %v2268 = vrot.slane %v1613, 4
        %v2269 = vsel %vm1876, %v2268, %v1585
        %v2271 = vunpack.c.l.s4 1934713408
        %v2272 = vunpack.c.0.s8 %v2271
        %v2273 = vperm.slane %v2269, %v2272
        %v2274 = vrot.slane %v2273, 4
        %v2275 = vsel %vm1876, 0.0, %v2274
        %v2276 = vrot.slane %v1669, 4
        %v2277 = vsel %vm1876, %v2276, %v1641
        %v2279 = vunpack.c.l.s4 1934713408
        %v2280 = vunpack.c.0.s8 %v2279
        %v2281 = vperm.slane %v2277, %v2280
        %v2282 = vrot.slane %v2281, 4
        %v2283 = vsel %vm1876, 0.0, %v2282
        %v2284 = vrot.slane %v1725, 4
        %v2285 = vsel %vm1876, %v2284, %v1697
        %v2287 = vunpack.c.l.s4 1934713408
        %v2288 = vunpack.c.0.s8 %v2287
        %v2289 = vperm.slane %v2285, %v2288
        %v2290 = vrot.slane %v2289, 4
        %v2291 = vsel %vm1876, 0.0, %v2290
        %v2292 = vrot.slane %v1564, 4
        %v2293 = vsel %vm1876, %v2292, %v1536
        %v2295 = vunpack.c.l.s4 1934713408
        %v2296 = vunpack.c.0.s8 %v2295
        %v2297 = vperm.slane %v2293, %v2296
        %v2298 = vrot.slane %v2297, 4
        %v2299 = vsel %vm1876, 0.0, %v2298
        %v2300 = vrot.slane %v1620, 4
        %v2301 = vsel %vm1876, %v2300, %v1592
        %v2303 = vunpack.c.l.s4 1934713408
        %v2304 = vunpack.c.0.s8 %v2303
        %v2305 = vperm.slane %v2301, %v2304
        %v2306 = vrot.slane %v2305, 4
        %v2307 = vsel %vm1876, 0.0, %v2306
        %v2308 = vrot.slane %v1676, 4
        %v2309 = vsel %vm1876, %v2308, %v1648
        %v2311 = vunpack.c.l.s4 1934713408
        %v2312 = vunpack.c.0.s8 %v2311
        %v2313 = vperm.slane %v2309, %v2312
        %v2314 = vrot.slane %v2313, 4
        %v2315 = vsel %vm1876, 0.0, %v2314
        %v2316 = vrot.slane %v1732, 4
        %v2317 = vsel %vm1876, %v2316, %v1704
        %v2319 = vunpack.c.l.s4 1934713408
        %v2320 = vunpack.c.0.s8 %v2319
        %v2321 = vperm.slane %v2317, %v2320
        %v2322 = vrot.slane %v2321, 4
        %v2323 = vsel %vm1876, 0.0, %v2322
        %v2324 = vrot.slane %v1571, 4
        %v2325 = vsel %vm1876, %v2324, %v1543
        %v2327 = vunpack.c.l.s4 1934713408
        %v2328 = vunpack.c.0.s8 %v2327
        %v2329 = vperm.slane %v2325, %v2328
        %v2330 = vrot.slane %v2329, 4
        %v2331 = vsel %vm1876, 0.0, %v2330
        %v2332 = vrot.slane %v1627, 4
        %v2333 = vsel %vm1876, %v2332, %v1599
        %v2335 = vunpack.c.l.s4 1934713408
        %v2336 = vunpack.c.0.s8 %v2335
        %v2337 = vperm.slane %v2333, %v2336
        %v2338 = vrot.slane %v2337, 4
        %v2339 = vsel %vm1876, 0.0, %v2338
        %v2340 = vrot.slane %v1683, 4
        %v2341 = vsel %vm1876, %v2340, %v1655
        %v2343 = vunpack.c.l.s4 1934713408
        %v2344 = vunpack.c.0.s8 %v2343
        %v2345 = vperm.slane %v2341, %v2344
        %v2346 = vrot.slane %v2345, 4
        %v2347 = vsel %vm1876, 0.0, %v2346
        %v2348 = vrot.slane %v1739, 4
        %v2349 = vsel %vm1876, %v2348, %v1711
        %v2351 = vunpack.c.l.s4 1934713408
        %v2352 = vunpack.c.0.s8 %v2351
        %v2353 = vperm.slane %v2349, %v2352
        %v2354 = vrot.slane %v2353, 4
        %v2355 = vsel %vm1876, 0.0, %v2354
        %v2356 = vrot.slane %v1578, 4
        %v2357 = vsel %vm1876, %v2356, %v1550
        %v2359 = vunpack.c.l.s4 1934713408
        %v2360 = vunpack.c.0.s8 %v2359
        %v2361 = vperm.slane %v2357, %v2360
        %v2362 = vrot.slane %v2361, 4
        %v2363 = vsel %vm1876, 0.0, %v2362
        %v2364 = vrot.slane %v1634, 4
        %v2365 = vsel %vm1876, %v2364, %v1606
        %v2367 = vunpack.c.l.s4 1934713408
        %v2368 = vunpack.c.0.s8 %v2367
        %v2369 = vperm.slane %v2365, %v2368
        %v2370 = vrot.slane %v2369, 4
        %v2371 = vsel %vm1876, 0.0, %v2370
        %v2372 = vrot.slane %v1690, 4
        %v2373 = vsel %vm1876, %v2372, %v1662
        %v2375 = vunpack.c.l.s4 1934713408
        %v2376 = vunpack.c.0.s8 %v2375
        %v2377 = vperm.slane %v2373, %v2376
        %v2378 = vrot.slane %v2377, 4
        %v2379 = vsel %vm1876, 0.0, %v2378
        %v2380 = vrot.slane %v1746, 4
        %v2381 = vsel %vm1876, %v2380, %v1718
        %v2383 = vunpack.c.l.s4 1934713408
        %v2384 = vunpack.c.0.s8 %v2383
        %v2385 = vperm.slane %v2381, %v2384
        %v2386 = vrot.slane %v2385, 4
        %v2387 = vsel %vm1876, 0.0, %v2386
        %2516 = vrot.lane.b32.xlu0 %v1881, 127
        %v2517 = vpop.permute.xlu0 %2516
        %2518 = vrot.lane.b32.xlu0 %v1889, 127
        %v2519 = vpop.permute.xlu0 %2518
        %2520 = vrot.lane.b32.xlu0 %v1897, 127
        %v2521 = vpop.permute.xlu0 %2520
        %2522 = vrot.lane.b32.xlu0 %v1905, 127
        %v2523 = vpop.permute.xlu0 %2522
        %2524 = vrot.lane.b32.xlu0 %v1883, 127
        %v2525 = vpop.permute.xlu0 %2524
        %2526 = vrot.lane.b32.xlu0 %v1891, 127
        %v2527 = vpop.permute.xlu0 %2526
        %2528 = vrot.lane.b32.xlu0 %v1899, 127
        %v2529 = vpop.permute.xlu0 %2528
        %2530 = vrot.lane.b32.xlu0 %v1907, 127
        %v2531 = vpop.permute.xlu0 %2530
        %2532 = vrot.lane.b32.xlu0 %v1913, 127
        %v2533 = vpop.permute.xlu0 %2532
        %2534 = vrot.lane.b32.xlu0 %v1921, 127
        %v2535 = vpop.permute.xlu0 %2534
        %2536 = vrot.lane.b32.xlu0 %v1929, 127
        %v2537 = vpop.permute.xlu0 %2536
        %2538 = vrot.lane.b32.xlu0 %v1937, 127
        %v2539 = vpop.permute.xlu0 %2538
        %2540 = vrot.lane.b32.xlu0 %v1915, 127
        %v2541 = vpop.permute.xlu0 %2540
        %2542 = vrot.lane.b32.xlu0 %v1923, 127
        %v2543 = vpop.permute.xlu0 %2542
        %2544 = vrot.lane.b32.xlu0 %v1931, 127
        %v2545 = vpop.permute.xlu0 %2544
        %2546 = vrot.lane.b32.xlu0 %v1939, 127
        %v2547 = vpop.permute.xlu0 %2546
        %2548 = vrot.lane.b32.xlu0 %v1945, 127
        %v2549 = vpop.permute.xlu0 %2548
        %2550 = vrot.lane.b32.xlu0 %v1953, 127
        %v2551 = vpop.permute.xlu0 %2550
        %2552 = vrot.lane.b32.xlu0 %v1961, 127
        %v2553 = vpop.permute.xlu0 %2552
        %2554 = vrot.lane.b32.xlu0 %v1969, 127
        %v2555 = vpop.permute.xlu0 %2554
        %2556 = vrot.lane.b32.xlu0 %v1947, 127
        %v2557 = vpop.permute.xlu0 %2556
        %2558 = vrot.lane.b32.xlu0 %v1955, 127
        %v2559 = vpop.permute.xlu0 %2558
        %2560 = vrot.lane.b32.xlu0 %v1963, 127
        %v2561 = vpop.permute.xlu0 %2560
        %2562 = vrot.lane.b32.xlu0 %v1971, 127
        %v2563 = vpop.permute.xlu0 %2562
        %2564 = vrot.lane.b32.xlu0 %v1977, 127
        %v2565 = vpop.permute.xlu0 %2564
        %2566 = vrot.lane.b32.xlu0 %v1985, 127
        %v2567 = vpop.permute.xlu0 %2566
        %2568 = vrot.lane.b32.xlu0 %v1993, 127
        %v2569 = vpop.permute.xlu0 %2568
        %2570 = vrot.lane.b32.xlu0 %v2001, 127
        %v2571 = vpop.permute.xlu0 %2570
        %2572 = vrot.lane.b32.xlu0 %v1979, 127
        %v2573 = vpop.permute.xlu0 %2572
        %2574 = vrot.lane.b32.xlu0 %v1987, 127
        %v2575 = vpop.permute.xlu0 %2574
        %2576 = vrot.lane.b32.xlu0 %v1995, 127
        %v2577 = vpop.permute.xlu0 %2576
        %2578 = vrot.lane.b32.xlu0 %v2003, 127
        %v2579 = vpop.permute.xlu0 %2578
        %2580 = vrot.lane.b32.xlu0 %v2009, 127
        %v2581 = vpop.permute.xlu0 %2580
        %2582 = vrot.lane.b32.xlu0 %v2017, 127
        %v2583 = vpop.permute.xlu0 %2582
        %2584 = vrot.lane.b32.xlu0 %v2025, 127
        %v2585 = vpop.permute.xlu0 %2584
        %2586 = vrot.lane.b32.xlu0 %v2033, 127
        %v2587 = vpop.permute.xlu0 %2586
        %2588 = vrot.lane.b32.xlu0 %v2011, 127
        %v2589 = vpop.permute.xlu0 %2588
        %2590 = vrot.lane.b32.xlu0 %v2019, 127
        %v2591 = vpop.permute.xlu0 %2590
        %2592 = vrot.lane.b32.xlu0 %v2027, 127
        %v2593 = vpop.permute.xlu0 %2592
        %2594 = vrot.lane.b32.xlu0 %v2035, 127
        %v2595 = vpop.permute.xlu0 %2594
        %2596 = vrot.lane.b32.xlu0 %v2041, 127
        %v2597 = vpop.permute.xlu0 %2596
        %2598 = vrot.lane.b32.xlu0 %v2049, 127
        %v2599 = vpop.permute.xlu0 %2598
        %2600 = vrot.lane.b32.xlu0 %v2057, 127
        %v2601 = vpop.permute.xlu0 %2600
        %2602 = vrot.lane.b32.xlu0 %v2065, 127
        %v2603 = vpop.permute.xlu0 %2602
        %2604 = vrot.lane.b32.xlu0 %v2043, 127
        %v2605 = vpop.permute.xlu0 %2604
        %2606 = vrot.lane.b32.xlu0 %v2051, 127
        %v2607 = vpop.permute.xlu0 %2606
        %2608 = vrot.lane.b32.xlu0 %v2059, 127
        %v2609 = vpop.permute.xlu0 %2608
        %2610 = vrot.lane.b32.xlu0 %v2067, 127
        %v2611 = vpop.permute.xlu0 %2610
        %2612 = vrot.lane.b32.xlu0 %v2073, 127
        %v2613 = vpop.permute.xlu0 %2612
        %2614 = vrot.lane.b32.xlu0 %v2081, 127
        %v2615 = vpop.permute.xlu0 %2614
        %2616 = vrot.lane.b32.xlu0 %v2089, 127
        %v2617 = vpop.permute.xlu0 %2616
        %2618 = vrot.lane.b32.xlu0 %v2097, 127
        %v2619 = vpop.permute.xlu0 %2618
        %2620 = vrot.lane.b32.xlu0 %v2075, 127
        %v2621 = vpop.permute.xlu0 %2620
        %2622 = vrot.lane.b32.xlu0 %v2083, 127
        %v2623 = vpop.permute.xlu0 %2622
        %2624 = vrot.lane.b32.xlu0 %v2091, 127
        %v2625 = vpop.permute.xlu0 %2624
        %2626 = vrot.lane.b32.xlu0 %v2099, 127
        %v2627 = vpop.permute.xlu0 %2626
        %2628 = vrot.lane.b32.xlu0 %v2105, 127
        %v2629 = vpop.permute.xlu0 %2628
        %2630 = vrot.lane.b32.xlu0 %v2113, 127
        %v2631 = vpop.permute.xlu0 %2630
        %2632 = vrot.lane.b32.xlu0 %v2121, 127
        %v2633 = vpop.permute.xlu0 %2632
        %2634 = vrot.lane.b32.xlu0 %v2129, 127
        %v2635 = vpop.permute.xlu0 %2634
        %2636 = vrot.lane.b32.xlu0 %v2107, 127
        %v2637 = vpop.permute.xlu0 %2636
        %2638 = vrot.lane.b32.xlu0 %v2115, 127
        %v2639 = vpop.permute.xlu0 %2638
        %2640 = vrot.lane.b32.xlu0 %v2123, 127
        %v2641 = vpop.permute.xlu0 %2640
        %2642 = vrot.lane.b32.xlu0 %v2131, 127
        %v2643 = vpop.permute.xlu0 %2642
        %2644 = vrot.lane.b32.xlu0 %v2137, 127
        %v2645 = vpop.permute.xlu0 %2644
        %2646 = vrot.lane.b32.xlu0 %v2145, 127
        %v2647 = vpop.permute.xlu0 %2646
        %2648 = vrot.lane.b32.xlu0 %v2153, 127
        %v2649 = vpop.permute.xlu0 %2648
        %2650 = vrot.lane.b32.xlu0 %v2161, 127
        %v2651 = vpop.permute.xlu0 %2650
        %2652 = vrot.lane.b32.xlu0 %v2139, 127
        %v2653 = vpop.permute.xlu0 %2652
        %2654 = vrot.lane.b32.xlu0 %v2147, 127
        %v2655 = vpop.permute.xlu0 %2654
        %2656 = vrot.lane.b32.xlu0 %v2155, 127
        %v2657 = vpop.permute.xlu0 %2656
        %2658 = vrot.lane.b32.xlu0 %v2163, 127
        %v2659 = vpop.permute.xlu0 %2658
        %2660 = vrot.lane.b32.xlu0 %v2169, 127
        %v2661 = vpop.permute.xlu0 %2660
        %2662 = vrot.lane.b32.xlu0 %v2177, 127
        %v2663 = vpop.permute.xlu0 %2662
        %2664 = vrot.lane.b32.xlu0 %v2185, 127
        %v2665 = vpop.permute.xlu0 %2664
        %2666 = vrot.lane.b32.xlu0 %v2193, 127
        %v2667 = vpop.permute.xlu0 %2666
        %2668 = vrot.lane.b32.xlu0 %v2171, 127
        %v2669 = vpop.permute.xlu0 %2668
        %2670 = vrot.lane.b32.xlu0 %v2179, 127
        %v2671 = vpop.permute.xlu0 %2670
        %2672 = vrot.lane.b32.xlu0 %v2187, 127
        %v2673 = vpop.permute.xlu0 %2672
        %2674 = vrot.lane.b32.xlu0 %v2195, 127
        %v2675 = vpop.permute.xlu0 %2674
        %2676 = vrot.lane.b32.xlu0 %v2201, 127
        %v2677 = vpop.permute.xlu0 %2676
        %2678 = vrot.lane.b32.xlu0 %v2209, 127
        %v2679 = vpop.permute.xlu0 %2678
        %2680 = vrot.lane.b32.xlu0 %v2217, 127
        %v2681 = vpop.permute.xlu0 %2680
        %2682 = vrot.lane.b32.xlu0 %v2225, 127
        %v2683 = vpop.permute.xlu0 %2682
        %2684 = vrot.lane.b32.xlu0 %v2203, 127
        %v2685 = vpop.permute.xlu0 %2684
        %2686 = vrot.lane.b32.xlu0 %v2211, 127
        %v2687 = vpop.permute.xlu0 %2686
        %2688 = vrot.lane.b32.xlu0 %v2219, 127
        %v2689 = vpop.permute.xlu0 %2688
        %2690 = vrot.lane.b32.xlu0 %v2227, 127
        %v2691 = vpop.permute.xlu0 %2690
        %2692 = vrot.lane.b32.xlu0 %v2233, 127
        %v2693 = vpop.permute.xlu0 %2692
        %2694 = vrot.lane.b32.xlu0 %v2241, 127
        %v2695 = vpop.permute.xlu0 %2694
        %2696 = vrot.lane.b32.xlu0 %v2249, 127
        %v2697 = vpop.permute.xlu0 %2696
        %2698 = vrot.lane.b32.xlu0 %v2257, 127
        %v2699 = vpop.permute.xlu0 %2698
        %2700 = vrot.lane.b32.xlu0 %v2235, 127
        %v2701 = vpop.permute.xlu0 %2700
        %2702 = vrot.lane.b32.xlu0 %v2243, 127
        %v2703 = vpop.permute.xlu0 %2702
        %2704 = vrot.lane.b32.xlu0 %v2251, 127
        %v2705 = vpop.permute.xlu0 %2704
        %2706 = vrot.lane.b32.xlu0 %v2259, 127
        %v2707 = vpop.permute.xlu0 %2706
        %2708 = vrot.lane.b32.xlu0 %v2265, 127
        %v2709 = vpop.permute.xlu0 %2708
        %2710 = vrot.lane.b32.xlu0 %v2273, 127
        %v2711 = vpop.permute.xlu0 %2710
        %2712 = vrot.lane.b32.xlu0 %v2281, 127
        %v2713 = vpop.permute.xlu0 %2712
        %2714 = vrot.lane.b32.xlu0 %v2289, 127
        %v2715 = vpop.permute.xlu0 %2714
        %2716 = vrot.lane.b32.xlu0 %v2267, 127
        %v2717 = vpop.permute.xlu0 %2716
        %2718 = vrot.lane.b32.xlu0 %v2275, 127
        %v2719 = vpop.permute.xlu0 %2718
        %2720 = vrot.lane.b32.xlu0 %v2283, 127
        %v2721 = vpop.permute.xlu0 %2720
        %2722 = vrot.lane.b32.xlu0 %v2291, 127
        %v2723 = vpop.permute.xlu0 %2722
        %2724 = vrot.lane.b32.xlu0 %v2297, 127
        %v2725 = vpop.permute.xlu0 %2724
        %2726 = vrot.lane.b32.xlu0 %v2305, 127
        %v2727 = vpop.permute.xlu0 %2726
        %2728 = vrot.lane.b32.xlu0 %v2313, 127
        %v2729 = vpop.permute.xlu0 %2728
        %2730 = vrot.lane.b32.xlu0 %v2321, 127
        %v2731 = vpop.permute.xlu0 %2730
        %2732 = vrot.lane.b32.xlu0 %v2299, 127
        %v2733 = vpop.permute.xlu0 %2732
        %2734 = vrot.lane.b32.xlu0 %v2307, 127
        %v2735 = vpop.permute.xlu0 %2734
        %2736 = vrot.lane.b32.xlu0 %v2315, 127
        %v2737 = vpop.permute.xlu0 %2736
        %2738 = vrot.lane.b32.xlu0 %v2323, 127
        %v2739 = vpop.permute.xlu0 %2738
        %2740 = vrot.lane.b32.xlu0 %v2329, 127
        %v2741 = vpop.permute.xlu0 %2740
        %2742 = vrot.lane.b32.xlu0 %v2337, 127
        %v2743 = vpop.permute.xlu0 %2742
        %2744 = vrot.lane.b32.xlu0 %v2345, 127
        %v2745 = vpop.permute.xlu0 %2744
        %2746 = vrot.lane.b32.xlu0 %v2353, 127
        %v2747 = vpop.permute.xlu0 %2746
        %2748 = vrot.lane.b32.xlu0 %v2331, 127
        %v2749 = vpop.permute.xlu0 %2748
        %2750 = vrot.lane.b32.xlu0 %v2339, 127
        %v2751 = vpop.permute.xlu0 %2750
        %2752 = vrot.lane.b32.xlu0 %v2347, 127
        %v2753 = vpop.permute.xlu0 %2752
        %2754 = vrot.lane.b32.xlu0 %v2355, 127
        %v2755 = vpop.permute.xlu0 %2754
        %2756 = vrot.lane.b32.xlu0 %v2361, 127
        %v2757 = vpop.permute.xlu0 %2756
        %2758 = vrot.lane.b32.xlu0 %v2369, 127
        %v2759 = vpop.permute.xlu0 %2758
        %2760 = vrot.lane.b32.xlu0 %v2377, 127
        %v2761 = vpop.permute.xlu0 %2760
        %2762 = vrot.lane.b32.xlu0 %v2385, 127
        %v2763 = vpop.permute.xlu0 %2762
        %2764 = vrot.lane.b32.xlu0 %v2363, 127
        %v2765 = vpop.permute.xlu0 %2764
        %2766 = vrot.lane.b32.xlu0 %v2371, 127
        %v2767 = vpop.permute.xlu0 %2766
        %2768 = vrot.lane.b32.xlu0 %v2379, 127
        %v2769 = vpop.permute.xlu0 %2768
        %2770 = vrot.lane.b32.xlu0 %v2387, 127
        %v2771 = vpop.permute.xlu0 %2770
        %v2900 = vadd.f32 %v1881, %v2517
        %v2901 = vadd.f32 %v1889, %v2519
        %v2902 = vadd.f32 %v1897, %v2521
        %v2903 = vadd.f32 %v1905, %v2523
        %v2904 = vadd.f32 %v1883, %v2525
        %v2905 = vadd.f32 %v1891, %v2527
        %v2906 = vadd.f32 %v1899, %v2529
        %v2907 = vadd.f32 %v1907, %v2531
        %v2908 = vadd.f32 %v1913, %v2533
        %v2909 = vadd.f32 %v1921, %v2535
        %v2910 = vadd.f32 %v1929, %v2537
        %v2911 = vadd.f32 %v1937, %v2539
        %v2912 = vadd.f32 %v1915, %v2541
        %v2913 = vadd.f32 %v1923, %v2543
        %v2914 = vadd.f32 %v1931, %v2545
        %v2915 = vadd.f32 %v1939, %v2547
        %v2916 = vadd.f32 %v1945, %v2549
        %v2917 = vadd.f32 %v1953, %v2551
        %v2918 = vadd.f32 %v1961, %v2553
        %v2919 = vadd.f32 %v1969, %v2555
        %v2920 = vadd.f32 %v1947, %v2557
        %v2921 = vadd.f32 %v1955, %v2559
        %v2922 = vadd.f32 %v1963, %v2561
        %v2923 = vadd.f32 %v1971, %v2563
        %v2924 = vadd.f32 %v1977, %v2565
        %v2925 = vadd.f32 %v1985, %v2567
        %v2926 = vadd.f32 %v1993, %v2569
        %v2927 = vadd.f32 %v2001, %v2571
        %v2928 = vadd.f32 %v1979, %v2573
        %v2929 = vadd.f32 %v1987, %v2575
        %v2930 = vadd.f32 %v1995, %v2577
        %v2931 = vadd.f32 %v2003, %v2579
        %v2932 = vadd.f32 %v2009, %v2581
        %v2933 = vadd.f32 %v2017, %v2583
        %v2934 = vadd.f32 %v2025, %v2585
        %v2935 = vadd.f32 %v2033, %v2587
        %v2936 = vadd.f32 %v2011, %v2589
        %v2937 = vadd.f32 %v2019, %v2591
        %v2938 = vadd.f32 %v2027, %v2593
        %v2939 = vadd.f32 %v2035, %v2595
        %v2940 = vadd.f32 %v2041, %v2597
        %v2941 = vadd.f32 %v2049, %v2599
        %v2942 = vadd.f32 %v2057, %v2601
        %v2943 = vadd.f32 %v2065, %v2603
        %v2944 = vadd.f32 %v2043, %v2605
        %v2945 = vadd.f32 %v2051, %v2607
        %v2946 = vadd.f32 %v2059, %v2609
        %v2947 = vadd.f32 %v2067, %v2611
        %v2948 = vadd.f32 %v2073, %v2613
        %v2949 = vadd.f32 %v2081, %v2615
        %v2950 = vadd.f32 %v2089, %v2617
        %v2951 = vadd.f32 %v2097, %v2619
        %v2952 = vadd.f32 %v2075, %v2621
        %v2953 = vadd.f32 %v2083, %v2623
        %v2954 = vadd.f32 %v2091, %v2625
        %v2955 = vadd.f32 %v2099, %v2627
        %v2956 = vadd.f32 %v2105, %v2629
        %v2957 = vadd.f32 %v2113, %v2631
        %v2958 = vadd.f32 %v2121, %v2633
        %v2959 = vadd.f32 %v2129, %v2635
        %v2960 = vadd.f32 %v2107, %v2637
        %v2961 = vadd.f32 %v2115, %v2639
        %v2962 = vadd.f32 %v2123, %v2641
        %v2963 = vadd.f32 %v2131, %v2643
        %v2964 = vadd.f32 %v2137, %v2645
        %v2965 = vadd.f32 %v2145, %v2647
        %v2966 = vadd.f32 %v2153, %v2649
        %v2967 = vadd.f32 %v2161, %v2651
        %v2968 = vadd.f32 %v2139, %v2653
        %v2969 = vadd.f32 %v2147, %v2655
        %v2970 = vadd.f32 %v2155, %v2657
        %v2971 = vadd.f32 %v2163, %v2659
        %v2972 = vadd.f32 %v2169, %v2661
        %v2973 = vadd.f32 %v2177, %v2663
        %v2974 = vadd.f32 %v2185, %v2665
        %v2975 = vadd.f32 %v2193, %v2667
        %v2976 = vadd.f32 %v2171, %v2669
        %v2977 = vadd.f32 %v2179, %v2671
        %v2978 = vadd.f32 %v2187, %v2673
        %v2979 = vadd.f32 %v2195, %v2675
        %v2980 = vadd.f32 %v2201, %v2677
        %v2981 = vadd.f32 %v2209, %v2679
        %v2982 = vadd.f32 %v2217, %v2681
        %v2983 = vadd.f32 %v2225, %v2683
        %v2984 = vadd.f32 %v2203, %v2685
        %v2985 = vadd.f32 %v2211, %v2687
        %v2986 = vadd.f32 %v2219, %v2689
        %v2987 = vadd.f32 %v2227, %v2691
        %v2988 = vadd.f32 %v2233, %v2693
        %v2989 = vadd.f32 %v2241, %v2695
        %v2990 = vadd.f32 %v2249, %v2697
        %v2991 = vadd.f32 %v2257, %v2699
        %v2992 = vadd.f32 %v2235, %v2701
        %v2993 = vadd.f32 %v2243, %v2703
        %v2994 = vadd.f32 %v2251, %v2705
        %v2995 = vadd.f32 %v2259, %v2707
        %v2996 = vadd.f32 %v2265, %v2709
        %v2997 = vadd.f32 %v2273, %v2711
        %v2998 = vadd.f32 %v2281, %v2713
        %v2999 = vadd.f32 %v2289, %v2715
        %v3000 = vadd.f32 %v2267, %v2717
        %v3001 = vadd.f32 %v2275, %v2719
        %v3002 = vadd.f32 %v2283, %v2721
        %v3003 = vadd.f32 %v2291, %v2723
        %v3004 = vadd.f32 %v2297, %v2725
        %v3005 = vadd.f32 %v2305, %v2727
        %v3006 = vadd.f32 %v2313, %v2729
        %v3007 = vadd.f32 %v2321, %v2731
        %v3008 = vadd.f32 %v2299, %v2733
        %v3009 = vadd.f32 %v2307, %v2735
        %v3010 = vadd.f32 %v2315, %v2737
        %v3011 = vadd.f32 %v2323, %v2739
        %v3012 = vadd.f32 %v2329, %v2741
        %v3013 = vadd.f32 %v2337, %v2743
        %v3014 = vadd.f32 %v2345, %v2745
        %v3015 = vadd.f32 %v2353, %v2747
        %v3016 = vadd.f32 %v2331, %v2749
        %v3017 = vadd.f32 %v2339, %v2751
        %v3018 = vadd.f32 %v2347, %v2753
        %v3019 = vadd.f32 %v2355, %v2755
        %v3020 = vadd.f32 %v2361, %v2757
        %v3021 = vadd.f32 %v2369, %v2759
        %v3022 = vadd.f32 %v2377, %v2761
        %v3023 = vadd.f32 %v2385, %v2763
        %v3024 = vadd.f32 %v2363, %v2765
        %v3025 = vadd.f32 %v2371, %v2767
        %v3026 = vadd.f32 %v2379, %v2769
        %v3027 = vadd.f32 %v2387, %v2771
        %v3028 = vmul.f32 %v2900, 0.25
        %v3029 = vmul.f32 %v2901, 0.25
        %v3030 = vmul.f32 %v2902, 0.25
        %v3031 = vmul.f32 %v2903, 0.25
        %v3032 = vmul.f32 %v2904, 0.25
        %v3033 = vmul.f32 %v2905, 0.25
        %v3034 = vmul.f32 %v2906, 0.25
        %v3035 = vmul.f32 %v2907, 0.25
        %v3036 = vmul.f32 %v2908, 0.25
        %v3037 = vmul.f32 %v2909, 0.25
        %v3038 = vmul.f32 %v2910, 0.25
        %v3039 = vmul.f32 %v2911, 0.25
        %v3040 = vmul.f32 %v2912, 0.25
        %v3041 = vmul.f32 %v2913, 0.25
        %v3042 = vmul.f32 %v2914, 0.25
        %v3043 = vmul.f32 %v2915, 0.25
        %v3044 = vmul.f32 %v2916, 0.25
        %v3045 = vmul.f32 %v2917, 0.25
        %v3046 = vmul.f32 %v2918, 0.25
        %v3047 = vmul.f32 %v2919, 0.25
        %v3048 = vmul.f32 %v2920, 0.25
        %v3049 = vmul.f32 %v2921, 0.25
        %v3050 = vmul.f32 %v2922, 0.25
        %v3051 = vmul.f32 %v2923, 0.25
        %v3052 = vmul.f32 %v2924, 0.25
        %v3053 = vmul.f32 %v2925, 0.25
        %v3054 = vmul.f32 %v2926, 0.25
        %v3055 = vmul.f32 %v2927, 0.25
        %v3056 = vmul.f32 %v2928, 0.25
        %v3057 = vmul.f32 %v2929, 0.25
        %v3058 = vmul.f32 %v2930, 0.25
        %v3059 = vmul.f32 %v2931, 0.25
        %v3060 = vmul.f32 %v2932, 0.25
        %v3061 = vmul.f32 %v2933, 0.25
        %v3062 = vmul.f32 %v2934, 0.25
        %v3063 = vmul.f32 %v2935, 0.25
        %v3064 = vmul.f32 %v2936, 0.25
        %v3065 = vmul.f32 %v2937, 0.25
        %v3066 = vmul.f32 %v2938, 0.25
        %v3067 = vmul.f32 %v2939, 0.25
        %v3068 = vmul.f32 %v2940, 0.25
        %v3069 = vmul.f32 %v2941, 0.25
        %v3070 = vmul.f32 %v2942, 0.25
        %v3071 = vmul.f32 %v2943, 0.25
        %v3072 = vmul.f32 %v2944, 0.25
        %v3073 = vmul.f32 %v2945, 0.25
        %v3074 = vmul.f32 %v2946, 0.25
        %v3075 = vmul.f32 %v2947, 0.25
        %v3076 = vmul.f32 %v2948, 0.25
        %v3077 = vmul.f32 %v2949, 0.25
        %v3078 = vmul.f32 %v2950, 0.25
        %v3079 = vmul.f32 %v2951, 0.25
        %v3080 = vmul.f32 %v2952, 0.25
        %v3081 = vmul.f32 %v2953, 0.25
        %v3082 = vmul.f32 %v2954, 0.25
        %v3083 = vmul.f32 %v2955, 0.25
        %v3084 = vmul.f32 %v2956, 0.25
        %v3085 = vmul.f32 %v2957, 0.25
        %v3086 = vmul.f32 %v2958, 0.25
        %v3087 = vmul.f32 %v2959, 0.25
        %v3088 = vmul.f32 %v2960, 0.25
        %v3089 = vmul.f32 %v2961, 0.25
        %v3090 = vmul.f32 %v2962, 0.25
        %v3091 = vmul.f32 %v2963, 0.25
        %v3092 = vmul.f32 %v2964, 0.25
        %v3093 = vmul.f32 %v2965, 0.25
        %v3094 = vmul.f32 %v2966, 0.25
        %v3095 = vmul.f32 %v2967, 0.25
        %v3096 = vmul.f32 %v2968, 0.25
        %v3097 = vmul.f32 %v2969, 0.25
        %v3098 = vmul.f32 %v2970, 0.25
        %v3099 = vmul.f32 %v2971, 0.25
        %v3100 = vmul.f32 %v2972, 0.25
        %v3101 = vmul.f32 %v2973, 0.25
        %v3102 = vmul.f32 %v2974, 0.25
        %v3103 = vmul.f32 %v2975, 0.25
        %v3104 = vmul.f32 %v2976, 0.25
        %v3105 = vmul.f32 %v2977, 0.25
        %v3106 = vmul.f32 %v2978, 0.25
        %v3107 = vmul.f32 %v2979, 0.25
        %v3108 = vmul.f32 %v2980, 0.25
        %v3109 = vmul.f32 %v2981, 0.25
        %v3110 = vmul.f32 %v2982, 0.25
        %v3111 = vmul.f32 %v2983, 0.25
        %v3112 = vmul.f32 %v2984, 0.25
        %v3113 = vmul.f32 %v2985, 0.25
        %v3114 = vmul.f32 %v2986, 0.25
        %v3115 = vmul.f32 %v2987, 0.25
        %v3116 = vmul.f32 %v2988, 0.25
        %v3117 = vmul.f32 %v2989, 0.25
        %v3118 = vmul.f32 %v2990, 0.25
        %v3119 = vmul.f32 %v2991, 0.25
        %v3120 = vmul.f32 %v2992, 0.25
        %v3121 = vmul.f32 %v2993, 0.25
        %v3122 = vmul.f32 %v2994, 0.25
        %v3123 = vmul.f32 %v2995, 0.25
        %v3124 = vmul.f32 %v2996, 0.25
        %v3125 = vmul.f32 %v2997, 0.25
        %v3126 = vmul.f32 %v2998, 0.25
        %v3127 = vmul.f32 %v2999, 0.25
        %v3128 = vmul.f32 %v3000, 0.25
        %v3129 = vmul.f32 %v3001, 0.25
        %v3130 = vmul.f32 %v3002, 0.25
        %v3131 = vmul.f32 %v3003, 0.25
        %v3132 = vmul.f32 %v3004, 0.25
        %v3133 = vmul.f32 %v3005, 0.25
        %v3134 = vmul.f32 %v3006, 0.25
        %v3135 = vmul.f32 %v3007, 0.25
        %v3136 = vmul.f32 %v3008, 0.25
        %v3137 = vmul.f32 %v3009, 0.25
        %v3138 = vmul.f32 %v3010, 0.25
        %v3139 = vmul.f32 %v3011, 0.25
        %v3140 = vmul.f32 %v3012, 0.25
        %v3141 = vmul.f32 %v3013, 0.25
        %v3142 = vmul.f32 %v3014, 0.25
        %v3143 = vmul.f32 %v3015, 0.25
        %v3144 = vmul.f32 %v3016, 0.25
        %v3145 = vmul.f32 %v3017, 0.25
        %v3146 = vmul.f32 %v3018, 0.25
        %v3147 = vmul.f32 %v3019, 0.25
        %v3148 = vmul.f32 %v3020, 0.25
        %v3149 = vmul.f32 %v3021, 0.25
        %v3150 = vmul.f32 %v3022, 0.25
        %v3151 = vmul.f32 %v3023, 0.25
        %v3152 = vmul.f32 %v3024, 0.25
        %v3153 = vmul.f32 %v3025, 0.25
        %v3154 = vmul.f32 %v3026, 0.25
        %v3155 = vmul.f32 %v3027, 0.25
        %3284 = vst [vmem:[#allocation1] ss:$4 sm:$0xff] %v3028
        %s3285 = scalar_lea.vmem [#allocation1], 1
        %3286 = vst [vmem:[%s3285] ss:$4 sm:$0xff] %v3029
        %s3287 = scalar_lea.vmem [#allocation1], 2
        %3288 = vst [vmem:[%s3287] ss:$4 sm:$0xff] %v3030
        %s3289 = scalar_lea.vmem [#allocation1], 3
        %3290 = vst [vmem:[%s3289] ss:$4 sm:$0xff] %v3031
        %v3291 = vld.sshfl [vmem:[#allocation1] sm:$0xff pattern:$0x73625140]
        %s3292 = scalar_lea.vmem [#allocation1], 32
        %3293 = vst [vmem:[%s3292] ss:$4 sm:$0xff] %v3032
        %s3294 = scalar_lea.vmem [#allocation1], 33
        %3295 = vst [vmem:[%s3294] ss:$4 sm:$0xff] %v3033
        %s3296 = scalar_lea.vmem [#allocation1], 34
        %3297 = vst [vmem:[%s3296] ss:$4 sm:$0xff] %v3034
        %s3298 = scalar_lea.vmem [#allocation1], 35
        %3299 = vst [vmem:[%s3298] ss:$4 sm:$0xff] %v3035
        %v3300 = vld.sshfl [vmem:[#allocation1 + $0x20] sm:$0xff pattern:$0x73625140]
        %3301 = vst [vmem:[#allocation1] ss:$4 sm:$0xff] %v3036
        %3302 = vst [vmem:[%s3285] ss:$4 sm:$0xff] %v3037
        %3303 = vst [vmem:[%s3287] ss:$4 sm:$0xff] %v3038
        %3304 = vst [vmem:[%s3289] ss:$4 sm:$0xff] %v3039
        %v3305 = vld.sshfl [vmem:[#allocation1] sm:$0xff pattern:$0x73625140]
        %3306 = vst [vmem:[%s3292] ss:$4 sm:$0xff] %v3040
        %3307 = vst [vmem:[%s3294] ss:$4 sm:$0xff] %v3041
        %3308 = vst [vmem:[%s3296] ss:$4 sm:$0xff] %v3042
        %3309 = vst [vmem:[%s3298] ss:$4 sm:$0xff] %v3043
        %v3310 = vld.sshfl [vmem:[#allocation1 + $0x20] sm:$0xff pattern:$0x73625140]
        %3311 = vst [vmem:[#allocation1] ss:$4 sm:$0xff] %v3044
        %3312 = vst [vmem:[%s3285] ss:$4 sm:$0xff] %v3045
        %3313 = vst [vmem:[%s3287] ss:$4 sm:$0xff] %v3046
        %3314 = vst [vmem:[%s3289] ss:$4 sm:$0xff] %v3047
        %v3315 = vld.sshfl [vmem:[#allocation1] sm:$0xff pattern:$0x73625140]
        %3316 = vst [vmem:[%s3292] ss:$4 sm:$0xff] %v3048
        %3317 = vst [vmem:[%s3294] ss:$4 sm:$0xff] %v3049
        %3318 = vst [vmem:[%s3296] ss:$4 sm:$0xff] %v3050
        %3319 = vst [vmem:[%s3298] ss:$4 sm:$0xff] %v3051
        %v3320 = vld.sshfl [vmem:[#allocation1 + $0x20] sm:$0xff pattern:$0x73625140]
        %3321 = vst [vmem:[#allocation1] ss:$4 sm:$0xff] %v3052
        %3322 = vst [vmem:[%s3285] ss:$4 sm:$0xff] %v3053
        %3323 = vst [vmem:[%s3287] ss:$4 sm:$0xff] %v3054
        %3324 = vst [vmem:[%s3289] ss:$4 sm:$0xff] %v3055
        %v3325 = vld.sshfl [vmem:[#allocation1] sm:$0xff pattern:$0x73625140]
        %3326 = vst [vmem:[%s3292] ss:$4 sm:$0xff] %v3056
        %3327 = vst [vmem:[%s3294] ss:$4 sm:$0xff] %v3057
        %3328 = vst [vmem:[%s3296] ss:$4 sm:$0xff] %v3058
        %3329 = vst [vmem:[%s3298] ss:$4 sm:$0xff] %v3059
        %v3330 = vld.sshfl [vmem:[#allocation1 + $0x20] sm:$0xff pattern:$0x73625140]
        %3331 = vst [vmem:[#allocation1] ss:$4 sm:$0xff] %v3060
        %3332 = vst [vmem:[%s3285] ss:$4 sm:$0xff] %v3061
        %3333 = vst [vmem:[%s3287] ss:$4 sm:$0xff] %v3062
        %3334 = vst [vmem:[%s3289] ss:$4 sm:$0xff] %v3063
        %v3335 = vld.sshfl [vmem:[#allocation1] sm:$0xff pattern:$0x73625140]
        %3336 = vst [vmem:[%s3292] ss:$4 sm:$0xff] %v3064
        %3337 = vst [vmem:[%s3294] ss:$4 sm:$0xff] %v3065
        %3338 = vst [vmem:[%s3296] ss:$4 sm:$0xff] %v3066
        %3339 = vst [vmem:[%s3298] ss:$4 sm:$0xff] %v3067
        %v3340 = vld.sshfl [vmem:[#allocation1 + $0x20] sm:$0xff pattern:$0x73625140]
        %3341 = vst [vmem:[#allocation1] ss:$4 sm:$0xff] %v3068
        %3342 = vst [vmem:[%s3285] ss:$4 sm:$0xff] %v3069
        %3343 = vst [vmem:[%s3287] ss:$4 sm:$0xff] %v3070
        %3344 = vst [vmem:[%s3289] ss:$4 sm:$0xff] %v3071
        %v3345 = vld.sshfl [vmem:[#allocation1] sm:$0xff pattern:$0x73625140]
        %3346 = vst [vmem:[%s3292] ss:$4 sm:$0xff] %v3072
        %3347 = vst [vmem:[%s3294] ss:$4 sm:$0xff] %v3073
        %3348 = vst [vmem:[%s3296] ss:$4 sm:$0xff] %v3074
        %3349 = vst [vmem:[%s3298] ss:$4 sm:$0xff] %v3075
        %v3350 = vld.sshfl [vmem:[#allocation1 + $0x20] sm:$0xff pattern:$0x73625140]
        %3351 = vst [vmem:[#allocation1] ss:$4 sm:$0xff] %v3076
        %3352 = vst [vmem:[%s3285] ss:$4 sm:$0xff] %v3077
        %3353 = vst [vmem:[%s3287] ss:$4 sm:$0xff] %v3078
        %3354 = vst [vmem:[%s3289] ss:$4 sm:$0xff] %v3079
        %v3355 = vld.sshfl [vmem:[#allocation1] sm:$0xff pattern:$0x73625140]
        %3356 = vst [vmem:[%s3292] ss:$4 sm:$0xff] %v3080
        %3357 = vst [vmem:[%s3294] ss:$4 sm:$0xff] %v3081
        %3358 = vst [vmem:[%s3296] ss:$4 sm:$0xff] %v3082
        %3359 = vst [vmem:[%s3298] ss:$4 sm:$0xff] %v3083
        %v3360 = vld.sshfl [vmem:[#allocation1 + $0x20] sm:$0xff pattern:$0x73625140]
        %3361 = vst [vmem:[#allocation1] ss:$4 sm:$0xff] %v3084
        %3362 = vst [vmem:[%s3285] ss:$4 sm:$0xff] %v3085
        %3363 = vst [vmem:[%s3287] ss:$4 sm:$0xff] %v3086
        %3364 = vst [vmem:[%s3289] ss:$4 sm:$0xff] %v3087
        %v3365 = vld.sshfl [vmem:[#allocation1] sm:$0xff pattern:$0x73625140]
        %3366 = vst [vmem:[%s3292] ss:$4 sm:$0xff] %v3088
        %3367 = vst [vmem:[%s3294] ss:$4 sm:$0xff] %v3089
        %3368 = vst [vmem:[%s3296] ss:$4 sm:$0xff] %v3090
        %3369 = vst [vmem:[%s3298] ss:$4 sm:$0xff] %v3091
        %v3370 = vld.sshfl [vmem:[#allocation1 + $0x20] sm:$0xff pattern:$0x73625140]
        %3371 = vst [vmem:[#allocation1] ss:$4 sm:$0xff] %v3092
        %3372 = vst [vmem:[%s3285] ss:$4 sm:$0xff] %v3093
        %3373 = vst [vmem:[%s3287] ss:$4 sm:$0xff] %v3094
        %3374 = vst [vmem:[%s3289] ss:$4 sm:$0xff] %v3095
        %v3375 = vld.sshfl [vmem:[#allocation1] sm:$0xff pattern:$0x73625140]
        %3376 = vst [vmem:[%s3292] ss:$4 sm:$0xff] %v3096
        %3377 = vst [vmem:[%s3294] ss:$4 sm:$0xff] %v3097
        %3378 = vst [vmem:[%s3296] ss:$4 sm:$0xff] %v3098
        %3379 = vst [vmem:[%s3298] ss:$4 sm:$0xff] %v3099
        %v3380 = vld.sshfl [vmem:[#allocation1 + $0x20] sm:$0xff pattern:$0x73625140]
        %3381 = vst [vmem:[#allocation1] ss:$4 sm:$0xff] %v3100
        %3382 = vst [vmem:[%s3285] ss:$4 sm:$0xff] %v3101
        %3383 = vst [vmem:[%s3287] ss:$4 sm:$0xff] %v3102
        %3384 = vst [vmem:[%s3289] ss:$4 sm:$0xff] %v3103
        %v3385 = vld.sshfl [vmem:[#allocation1] sm:$0xff pattern:$0x73625140]
        %3386 = vst [vmem:[%s3292] ss:$4 sm:$0xff] %v3104
        %3387 = vst [vmem:[%s3294] ss:$4 sm:$0xff] %v3105
        %3388 = vst [vmem:[%s3296] ss:$4 sm:$0xff] %v3106
        %3389 = vst [vmem:[%s3298] ss:$4 sm:$0xff] %v3107
        %v3390 = vld.sshfl [vmem:[#allocation1 + $0x20] sm:$0xff pattern:$0x73625140]
        %3391 = vst [vmem:[#allocation1] ss:$4 sm:$0xff] %v3108
        %3392 = vst [vmem:[%s3285] ss:$4 sm:$0xff] %v3109
        %3393 = vst [vmem:[%s3287] ss:$4 sm:$0xff] %v3110
        %3394 = vst [vmem:[%s3289] ss:$4 sm:$0xff] %v3111
        %v3395 = vld.sshfl [vmem:[#allocation1] sm:$0xff pattern:$0x73625140]
        %3396 = vst [vmem:[%s3292] ss:$4 sm:$0xff] %v3112
        %3397 = vst [vmem:[%s3294] ss:$4 sm:$0xff] %v3113
        %3398 = vst [vmem:[%s3296] ss:$4 sm:$0xff] %v3114
        %3399 = vst [vmem:[%s3298] ss:$4 sm:$0xff] %v3115
        %v3400 = vld.sshfl [vmem:[#allocation1 + $0x20] sm:$0xff pattern:$0x73625140]
        %3401 = vst [vmem:[#allocation1] ss:$4 sm:$0xff] %v3116
        %3402 = vst [vmem:[%s3285] ss:$4 sm:$0xff] %v3117
        %3403 = vst [vmem:[%s3287] ss:$4 sm:$0xff] %v3118
        %3404 = vst [vmem:[%s3289] ss:$4 sm:$0xff] %v3119
        %v3405 = vld.sshfl [vmem:[#allocation1] sm:$0xff pattern:$0x73625140]
        %3406 = vst [vmem:[%s3292] ss:$4 sm:$0xff] %v3120
        %3407 = vst [vmem:[%s3294] ss:$4 sm:$0xff] %v3121
        %3408 = vst [vmem:[%s3296] ss:$4 sm:$0xff] %v3122
        %3409 = vst [vmem:[%s3298] ss:$4 sm:$0xff] %v3123
        %v3410 = vld.sshfl [vmem:[#allocation1 + $0x20] sm:$0xff pattern:$0x73625140]
        %3411 = vst [vmem:[#allocation1] ss:$4 sm:$0xff] %v3124
        %3412 = vst [vmem:[%s3285] ss:$4 sm:$0xff] %v3125
        %3413 = vst [vmem:[%s3287] ss:$4 sm:$0xff] %v3126
        %3414 = vst [vmem:[%s3289] ss:$4 sm:$0xff] %v3127
        %v3415 = vld.sshfl [vmem:[#allocation1] sm:$0xff pattern:$0x73625140]
        %3416 = vst [vmem:[%s3292] ss:$4 sm:$0xff] %v3128
        %3417 = vst [vmem:[%s3294] ss:$4 sm:$0xff] %v3129
        %3418 = vst [vmem:[%s3296] ss:$4 sm:$0xff] %v3130
        %3419 = vst [vmem:[%s3298] ss:$4 sm:$0xff] %v3131
        %v3420 = vld.sshfl [vmem:[#allocation1 + $0x20] sm:$0xff pattern:$0x73625140]
        %3421 = vst [vmem:[#allocation1] ss:$4 sm:$0xff] %v3132
        %3422 = vst [vmem:[%s3285] ss:$4 sm:$0xff] %v3133
        %3423 = vst [vmem:[%s3287] ss:$4 sm:$0xff] %v3134
        %3424 = vst [vmem:[%s3289] ss:$4 sm:$0xff] %v3135
        %v3425 = vld.sshfl [vmem:[#allocation1] sm:$0xff pattern:$0x73625140]
        %3426 = vst [vmem:[%s3292] ss:$4 sm:$0xff] %v3136
        %3427 = vst [vmem:[%s3294] ss:$4 sm:$0xff] %v3137
        %3428 = vst [vmem:[%s3296] ss:$4 sm:$0xff] %v3138
        %3429 = vst [vmem:[%s3298] ss:$4 sm:$0xff] %v3139
        %v3430 = vld.sshfl [vmem:[#allocation1 + $0x20] sm:$0xff pattern:$0x73625140]
        %3431 = vst [vmem:[#allocation1] ss:$4 sm:$0xff] %v3140
        %3432 = vst [vmem:[%s3285] ss:$4 sm:$0xff] %v3141
        %3433 = vst [vmem:[%s3287] ss:$4 sm:$0xff] %v3142
        %3434 = vst [vmem:[%s3289] ss:$4 sm:$0xff] %v3143
        %v3435 = vld.sshfl [vmem:[#allocation1] sm:$0xff pattern:$0x73625140]
        %3436 = vst [vmem:[%s3292] ss:$4 sm:$0xff] %v3144
        %3437 = vst [vmem:[%s3294] ss:$4 sm:$0xff] %v3145
        %3438 = vst [vmem:[%s3296] ss:$4 sm:$0xff] %v3146
        %3439 = vst [vmem:[%s3298] ss:$4 sm:$0xff] %v3147
        %v3440 = vld.sshfl [vmem:[#allocation1 + $0x20] sm:$0xff pattern:$0x73625140]
        %3441 = vst [vmem:[#allocation1] ss:$4 sm:$0xff] %v3148
        %3442 = vst [vmem:[%s3285] ss:$4 sm:$0xff] %v3149
        %3443 = vst [vmem:[%s3287] ss:$4 sm:$0xff] %v3150
        %3444 = vst [vmem:[%s3289] ss:$4 sm:$0xff] %v3151
        %v3445 = vld.sshfl [vmem:[#allocation1] sm:$0xff pattern:$0x73625140]
        %3446 = vst [vmem:[%s3292] ss:$4 sm:$0xff] %v3152
        %3447 = vst [vmem:[%s3294] ss:$4 sm:$0xff] %v3153
        %3448 = vst [vmem:[%s3296] ss:$4 sm:$0xff] %v3154
        %3449 = vst [vmem:[%s3298] ss:$4 sm:$0xff] %v3155
        %v3450 = vld.sshfl [vmem:[#allocation1 + $0x20] sm:$0xff pattern:$0x73625140]
        %3451 = vset.pattern.permute.xlu0 0
        %3452 = vperm.xlu0 %3451, %v3291
        %v3453 = vpop.permute.xlu0 %3452
        %3454 = vset.pattern.permute.xlu0 0
        %3455 = vperm.xlu0 %3454, %v3300
        %v3456 = vpop.permute.xlu0 %3455
        %3457 = vset.pattern.permute.xlu0 0
        %3458 = vperm.xlu0 %3457, %v3305
        %v3459 = vpop.permute.xlu0 %3458
        %3460 = vset.pattern.permute.xlu0 0
        %3461 = vperm.xlu0 %3460, %v3310
        %v3462 = vpop.permute.xlu0 %3461
        %3463 = vset.pattern.permute.xlu0 0
        %3464 = vperm.xlu0 %3463, %v3315
        %v3465 = vpop.permute.xlu0 %3464
        %3466 = vset.pattern.permute.xlu0 0
        %3467 = vperm.xlu0 %3466, %v3320
        %v3468 = vpop.permute.xlu0 %3467
        %3469 = vset.pattern.permute.xlu0 0
        %3470 = vperm.xlu0 %3469, %v3325
        %v3471 = vpop.permute.xlu0 %3470
        %3472 = vset.pattern.permute.xlu0 0
        %3473 = vperm.xlu0 %3472, %v3330
        %v3474 = vpop.permute.xlu0 %3473
        %3475 = vset.pattern.permute.xlu0 0
        %3476 = vperm.xlu0 %3475, %v3335
        %v3477 = vpop.permute.xlu0 %3476
        %3478 = vset.pattern.permute.xlu0 0
        %3479 = vperm.xlu0 %3478, %v3340
        %v3480 = vpop.permute.xlu0 %3479
        %3481 = vset.pattern.permute.xlu0 0
        %3482 = vperm.xlu0 %3481, %v3345
        %v3483 = vpop.permute.xlu0 %3482
        %3484 = vset.pattern.permute.xlu0 0
        %3485 = vperm.xlu0 %3484, %v3350
        %v3486 = vpop.permute.xlu0 %3485
        %3487 = vset.pattern.permute.xlu0 0
        %3488 = vperm.xlu0 %3487, %v3355
        %v3489 = vpop.permute.xlu0 %3488
        %3490 = vset.pattern.permute.xlu0 0
        %3491 = vperm.xlu0 %3490, %v3360
        %v3492 = vpop.permute.xlu0 %3491
        %3493 = vset.pattern.permute.xlu0 0
        %3494 = vperm.xlu0 %3493, %v3365
        %v3495 = vpop.permute.xlu0 %3494
        %3496 = vset.pattern.permute.xlu0 0
        %3497 = vperm.xlu0 %3496, %v3370
        %v3498 = vpop.permute.xlu0 %3497
        %3499 = vset.pattern.permute.xlu0 0
        %3500 = vperm.xlu0 %3499, %v3375
        %v3501 = vpop.permute.xlu0 %3500
        %3502 = vset.pattern.permute.xlu0 0
        %3503 = vperm.xlu0 %3502, %v3380
        %v3504 = vpop.permute.xlu0 %3503
        %3505 = vset.pattern.permute.xlu0 0
        %3506 = vperm.xlu0 %3505, %v3385
        %v3507 = vpop.permute.xlu0 %3506
        %3508 = vset.pattern.permute.xlu0 0
        %3509 = vperm.xlu0 %3508, %v3390
        %v3510 = vpop.permute.xlu0 %3509
        %3511 = vset.pattern.permute.xlu0 0
        %3512 = vperm.xlu0 %3511, %v3395
        %v3513 = vpop.permute.xlu0 %3512
        %3514 = vset.pattern.permute.xlu0 0
        %3515 = vperm.xlu0 %3514, %v3400
        %v3516 = vpop.permute.xlu0 %3515
        %3517 = vset.pattern.permute.xlu0 0
        %3518 = vperm.xlu0 %3517, %v3405
        %v3519 = vpop.permute.xlu0 %3518
        %3520 = vset.pattern.permute.xlu0 0
        %3521 = vperm.xlu0 %3520, %v3410
        %v3522 = vpop.permute.xlu0 %3521
        %3523 = vset.pattern.permute.xlu0 0
        %3524 = vperm.xlu0 %3523, %v3415
        %v3525 = vpop.permute.xlu0 %3524
        %3526 = vset.pattern.permute.xlu0 0
        %3527 = vperm.xlu0 %3526, %v3420
        %v3528 = vpop.permute.xlu0 %3527
        %3529 = vset.pattern.permute.xlu0 0
        %3530 = vperm.xlu0 %3529, %v3425
        %v3531 = vpop.permute.xlu0 %3530
        %3532 = vset.pattern.permute.xlu0 0
        %3533 = vperm.xlu0 %3532, %v3430
        %v3534 = vpop.permute.xlu0 %3533
        %3535 = vset.pattern.permute.xlu0 0
        %3536 = vperm.xlu0 %3535, %v3435
        %v3537 = vpop.permute.xlu0 %3536
        %3538 = vset.pattern.permute.xlu0 0
        %3539 = vperm.xlu0 %3538, %v3440
        %v3540 = vpop.permute.xlu0 %3539
        %3541 = vset.pattern.permute.xlu0 0
        %3542 = vperm.xlu0 %3541, %v3445
        %v3543 = vpop.permute.xlu0 %3542
        %3544 = vset.pattern.permute.xlu0 0
        %3545 = vperm.xlu0 %3544, %v3450
        %v3546 = vpop.permute.xlu0 %3545
        %v3547 = vlaneseq
        %v3548 = vand.u32 %v3547, 127
        %v3549 = vperm.slane %v3453, %v3548
        %v3550 = vperm.slane %v3456, %v3548
        %v3551 = vperm.slane %v3459, %v3548
        %v3552 = vperm.slane %v3462, %v3548
        %v3553 = vperm.slane %v3465, %v3548
        %v3554 = vperm.slane %v3468, %v3548
        %v3555 = vperm.slane %v3471, %v3548
        %v3556 = vperm.slane %v3474, %v3548
        %v3557 = vperm.slane %v3477, %v3548
        %v3558 = vperm.slane %v3480, %v3548
        %v3559 = vperm.slane %v3483, %v3548
        %v3560 = vperm.slane %v3486, %v3548
        %v3561 = vperm.slane %v3489, %v3548
        %v3562 = vperm.slane %v3492, %v3548
        %v3563 = vperm.slane %v3495, %v3548
        %v3564 = vperm.slane %v3498, %v3548
        %v3565 = vperm.slane %v3501, %v3548
        %v3566 = vperm.slane %v3504, %v3548
        %v3567 = vperm.slane %v3507, %v3548
        %v3568 = vperm.slane %v3510, %v3548
        %v3569 = vperm.slane %v3513, %v3548
        %v3570 = vperm.slane %v3516, %v3548
        %v3571 = vperm.slane %v3519, %v3548
        %v3572 = vperm.slane %v3522, %v3548
        %v3573 = vperm.slane %v3525, %v3548
        %v3574 = vperm.slane %v3528, %v3548
        %v3575 = vperm.slane %v3531, %v3548
        %v3576 = vperm.slane %v3534, %v3548
        %v3577 = vperm.slane %v3537, %v3548
        %v3578 = vperm.slane %v3540, %v3548
        %v3579 = vperm.slane %v3543, %v3548
        %v3580 = vperm.slane %v3546, %v3548
        %v3581 = vsel %vm850, %v3550, %v3549
        %v3582 = vsel %vm844, %v3551, %v3581
        %v3583 = vsel %vm852, %v3552, %v3582
        %v3584 = vsel %vm845, %v3553, %v3583
        %v3585 = vsel %vm854, %v3554, %v3584
        %v3586 = vsel %vm847, %v3555, %v3585
        %v3587 = vsel %vm856, %v3556, %v3586
        %v3588 = vsel %vm850, %v3558, %v3557
        %v3589 = vsel %vm844, %v3559, %v3588
        %v3590 = vsel %vm852, %v3560, %v3589
        %v3591 = vsel %vm845, %v3561, %v3590
        %v3592 = vsel %vm854, %v3562, %v3591
        %v3593 = vsel %vm847, %v3563, %v3592
        %v3594 = vsel %vm856, %v3564, %v3593
        %v3595 = vsel %vm850, %v3566, %v3565
        %v3596 = vsel %vm844, %v3567, %v3595
        %v3597 = vsel %vm852, %v3568, %v3596
        %v3598 = vsel %vm845, %v3569, %v3597
        %v3599 = vsel %vm854, %v3570, %v3598
        %v3600 = vsel %vm847, %v3571, %v3599
        %v3601 = vsel %vm856, %v3572, %v3600
        %v3602 = vsel %vm850, %v3574, %v3573
        %v3603 = vsel %vm844, %v3575, %v3602
        %v3604 = vsel %vm852, %v3576, %v3603
        %v3605 = vsel %vm845, %v3577, %v3604
        %v3606 = vsel %vm854, %v3578, %v3605
        %v3607 = vsel %vm847, %v3579, %v3606
        %v3608 = vsel %vm856, %v3580, %v3607
        %vm3613 = vcmask 64512
        %3614 = vst.msk [vmem:[%s168] sm:$0xff] %vm3613, %v3587
        %3615 = vst.msk [vmem:[%s168 + $0x8] sm:$0xff] %vm3613, %v3594
        %3616 = vst.msk [vmem:[%s168 + $0x10] sm:$0xff] %vm3613, %v3601
        %3617 = vst.msk [vmem:[%s168 + $0x18] sm:$0xff] %vm3613, %v3608
        %s3618 = sand.u32 %s79, 1
        %s3619 = scalar_lea.sflag [#allocation4], %s3618
        %s3620 = sand.u32 %s79, 1
        %s3621 = smul.addr %s3620, 32
        %s3622 = scalar_lea.vmem [#allocation5], %s3621
        // Predicated region
        $region29: #{tpu_custom_call.1} parent=23 // pred_check
          %p3623 = pneg %p89
        $region30: #{tpu_custom_call.1} parent=23 // pred_check_branch
          %3625 = sbr.rel (%p3623) target = $region32
        $region31: #{tpu_custom_call.1} parent=23 // pred_region
          %s3626 = smul.u32 4, %s24
          %3628 = vsyncadd %s3619, 0
          %s3629 = sadd.s32 %s25, %s3626
          %s3630 = smul.addr %s23, 4
          %s3631 = sadd.s32 %s3629, %s3630
          %s3632 = smul.addr %s3631, 8
          %s3633 = scalar_lea.hbm %s1, %s3632
          %s3634 = sshll.u32 %s3622, 4
          %s3635 = int_to_ptr.vmem [resolvable:$true] %s3634
          %s3636 = sshll.u32 %s3633, 4
          %s3637 = int_to_ptr.hbm [resolvable:$true] %s3636
          %3642 = dma.vmem_to_hbm [thread:$0]  %s3635, 512, %s3637, %s3619, 128, 128, 8
        $region32: #{tpu_custom_call.1} parent=23 // pred_fallthru
          _
      $region24: #{tpu_custom_call.1} parent=5 // pred_fallthru
        _
      %p3643 = scmp.le.s32.totalorder 2, %s13
      // Predicated region
      $region33: #{tpu_custom_call.1} parent=5 // pred_check
        %p3644 = pneg %p3643
      $region34: #{tpu_custom_call.1} parent=5 // pred_check_branch
        %3646 = sbr.rel (%p3644) target = $region36
      $region35: #{tpu_custom_call.1} parent=5 // pred_region
        %s3647 = ssub.s32 %s13, 2
        // Predicated region
        $region37: #{tpu_custom_call.1} parent=35 // pred_check
          %p3648 = pneg %p95
        $region38: #{tpu_custom_call.1} parent=35 // pred_check_branch
          %3650 = sbr.rel (%p3648) target = $region40
        $region39: #{tpu_custom_call.1} parent=35 // pred_region
          %s3651 = sand.u32 %s80, 1
          %s3652 = scalar_lea.sflag [#allocation4], %s3651
          %s3653 = sand.u32 %s80, 1
          %s3654 = smul.addr %s3653, 32
          %s3655 = scalar_lea.vmem [#allocation5], %s3654
          %3657 = dma.done %s3652, 512
        $region40: #{tpu_custom_call.1} parent=35 // pred_fallthru
          _
      $region36: #{tpu_custom_call.1} parent=5 // pred_fallthru
        _
    $region6: #{tpu_custom_call.1} parent=1 // loop_footer
      %s17 = sadd.s32 1, %s13
    $region7: #{tpu_custom_call.1} parent=1 // loop_footer_branch
      %12 = sbr.rel target = $region3
    $region8: #{tpu_custom_call.1} parent=1 // loop_exit
      _
    %3658 = vsyncpa [#allocation3], 1
    %s3659 = scalar_lea.sflag [#allocation3], 1
    %3660 = vsyncpa %s3659, 1
    %3661 = vsyncpa [#allocation4], 1
    %s3662 = scalar_lea.sflag [#allocation4], 1
    %3663 = vsyncpa %s3662, 1

</llo_original>
